<compile_context>
chip_gen: v5e
topology: v5e:2x2
jax: 0.10.0
libtpu: 0.0.40
codegen_flags: <defaults>
</compile_context>

<pallas_src>
import math
from functools import partial

import jax
import jax.numpy as jnp
from jax.experimental import pallas as pl
from jax.experimental.pallas import tpu as pltpu


# ----------------------------------------------------------------------------
# Fused kernel: embed (layer 0) + one encoder block per grid step
# ----------------------------------------------------------------------------
def _layernorm(x, g, b, eps=1e-5):
    mu = jnp.mean(x, axis=-1, keepdims=True)
    var = jnp.mean((x - mu) ** 2, axis=-1, keepdims=True)
    return (x - mu) * jax.lax.rsqrt(var + eps) * g + b


def sand_fused_kernel(x_ref, cwt_ref, cb_ref, bng_ref, bnb_ref, pe_ref,
                      wqkv_ref, bqkv_ref, wo_ref, bo_ref,
                      ln1g_ref, ln1b_ref, w1_ref, b1_ref, w2_ref, b2_ref,
                      ln2g_ref, ln2b_ref, o_ref, acc_ref,
                      *, n_heads, batch, seq_len):
    layer = pl.program_id(0)
    D = o_ref.shape[-1]
    dh = D // n_heads
    BT = batch * seq_len

    # ---- layer 0: Conv1d(k=1) -> BatchNorm1d(batch stats) -> ReLU -> +PE ----
    @pl.when(layer == 0)
    def _embed():
        xb = x_ref[...].astype(jnp.bfloat16)
        h = jnp.dot(xb, cwt_ref[...], preferred_element_type=jnp.float32)
        h = h + cb_ref[...]
        mean = jnp.mean(h, axis=0, keepdims=True)            # over B*T rows
        var = jnp.mean((h - mean) ** 2, axis=0, keepdims=True)
        hn = (h - mean) * jax.lax.rsqrt(var + 1e-5) * bng_ref[...] + bnb_ref[...]
        hn = jnp.maximum(hn, 0.0)                            # ReLU
        acc_ref[...] = hn + pe_ref[...]                      # + positional enc

    # ---- encoder block `layer` on the resident (B*T, D) activation ---------
    x = acc_ref[...]                                         # f32
    xb = x.astype(jnp.bfloat16)

    # fused QKV projection (1/sqrt(dh) already folded into Q weights/bias)
    qkv = jnp.dot(xb, wqkv_ref[0], preferred_element_type=jnp.float32)
    qkv = qkv + bqkv_ref[0]
    qkvb = qkv.astype(jnp.bfloat16)

    wo_t = wo_ref[0]                                         # (D, D) bf16
    attn = jnp.zeros((BT, D), jnp.float32)
    # TODO(synk): nn.Dropout inside MHA/FFN is stochastic; applied as identity.
    for h in range(n_heads):                                 # static head loop
        qh = qkvb[:, h * dh:(h + 1) * dh].reshape(batch, seq_len, dh)
        kh = qkvb[:, D + h * dh:D + (h + 1) * dh].reshape(batch, seq_len, dh)
        vh = qkvb[:, 2 * D + h * dh:2 * D + (h + 1) * dh].reshape(batch, seq_len, dh)
        s = jnp.einsum('btd,bsd->bts', qh, kh,
                       preferred_element_type=jnp.float32)   # (B, T, T)
        s = s - jnp.max(s, axis=-1, keepdims=True)
        p = jnp.exp(s)
        p = p * pl.reciprocal(jnp.sum(p, axis=-1, keepdims=True), approx=True)
        oh = jnp.einsum('bts,bsd->btd', p.astype(jnp.bfloat16), vh,
                        preferred_element_type=jnp.float32)  # (B, T, dh)
        # fold this head straight through its rows of the output projection
        attn = attn + jnp.dot(oh.reshape(BT, dh).astype(jnp.bfloat16),
                              wo_t[h * dh:(h + 1) * dh, :],
                              preferred_element_type=jnp.float32)
    attn = attn + bo_ref[0]

    a = _layernorm(x + attn, ln1g_ref[0], ln1b_ref[0])

    # position-wise feed-forward: Linear(D,D) -> ReLU -> Linear(D,D)
    h1 = jnp.dot(a.astype(jnp.bfloat16), w1_ref[0],
                 preferred_element_type=jnp.float32) + b1_ref[0]
    h1 = jnp.maximum(h1, 0.0)
    h2 = jnp.dot(h1.astype(jnp.bfloat16), w2_ref[0],
                 preferred_element_type=jnp.float32) + b2_ref[0]

    out = _layernorm(a + h2, ln2g_ref[0], ln2b_ref[0])
    acc_ref[...] = out                                        # stays in VMEM

    @pl.when(layer == pl.num_programs(0) - 1)
    def _store():
        o_ref[...] = out                                      # single HBM store


# ----------------------------------------------------------------------------
# Wrapper: host-side weight prep (transpose / stack / fold scale / bf16 cast)
# and a single pallas_call over the layer grid axis.
# ----------------------------------------------------------------------------
def encoder_layer_for_sand(x, params, n_heads):
    B, T, Fin = x.shape
    D = params["conv_w"].shape[0]
    blocks = params["blocks"]
    L = len(blocks)
    dh = D // n_heads
    scale = 1.0 / math.sqrt(dh)

    x_flat = x.reshape(B * T, Fin)
    conv_w_t = params["conv_w"].T.astype(jnp.bfloat16)           # (Fin, D)
    pe_bt = jnp.tile(params["pe"], (B, 1)).astype(jnp.float32)   # (B*T, D)

    def stack(name):
        return jnp.stack([blk[name] for blk in blocks])

    def stack_t(name):
        return jnp.stack([blk[name].T for blk in blocks]).astype(jnp.bfloat16)

    wqkv_t = jnp.stack([blk["wqkv"].T for blk in blocks])        # (L, D, 3D)
    wqkv_t = wqkv_t.at[:, :, :D].multiply(scale).astype(jnp.bfloat16)
    bqkv = stack("bqkv").at[:, :, :D].multiply(scale)            # (L, 1, 3D)
    wo_t, w1_t, w2_t = stack_t("wo"), stack_t("w1"), stack_t("w2")
    bo, b1, b2 = stack("bo"), stack("b1"), stack("b2")
    ln1_g, ln1_b = stack("ln1_g"), stack("ln1_b")
    ln2_g, ln2_b = stack("ln2_g"), stack("ln2_b")

    full2d = lambda shape: pl.BlockSpec(shape, lambda l: (0, 0))
    per_layer = lambda shape: pl.BlockSpec((1,) + shape, lambda l: (l, 0, 0))

    out = pl.pallas_call(
        partial(sand_fused_kernel, n_heads=n_heads, batch=B, seq_len=T),
        out_shape=jax.ShapeDtypeStruct((B * T, D), jnp.float32),
        grid=(L,),
        in_specs=[
            full2d((B * T, Fin)),            # x (flattened)
            full2d((Fin, D)),                # conv weight (pre-transposed)
            full2d((1, D)),                  # conv bias
            full2d((1, D)),                  # bn gamma
            full2d((1, D)),                  # bn beta
            full2d((B * T, D)),              # positional encoding (tiled)
            per_layer((D, 3 * D)),           # wqkv^T   (scale folded into Q)
            per_layer((1, 3 * D)),           # bqkv     (scale folded into Q)
            per_layer((D, D)),               # wo^T
            per_layer((1, D)),               # bo
            per_layer((1, D)),               # ln1 gamma
            per_layer((1, D)),               # ln1 beta
            per_layer((D, D)),               # w1^T
            per_layer((1, D)),               # b1
            per_layer((D, D)),               # w2^T
            per_layer((1, D)),               # b2
            per_layer((1, D)),               # ln2 gamma
            per_layer((1, D)),               # ln2 beta
        ],
        out_specs=pl.BlockSpec((B * T, D), lambda l: (0, 0)),
        scratch_shapes=[pltpu.VMEM((B * T, D), jnp.float32)],
        compiler_params=pltpu.CompilerParams(
            dimension_semantics=("arbitrary",)),
    )(x_flat, conv_w_t, params["conv_b"], params["bn_g"], params["bn_b"], pe_bt,
      wqkv_t, bqkv, wo_t, bo, ln1_g, ln1_b, w1_t, b1, w2_t, b2, ln2_g, ln2_b)

    return out.reshape(B, T, D)


# ----------------------------------------------------------------------------
# Deterministic parameter construction (shapes from the module's __init__)
# ----------------------------------------------------------------------------
def positional_encoding(T, D):
    pos = jnp.arange(T, dtype=jnp.float32)[:, None]
    div = jnp.exp(jnp.arange(0, D, 2, dtype=jnp.float32) * (-math.log(10000.0) / D))
    pe = jnp.zeros((T, D), jnp.float32)
    pe = pe.at[:, 0::2].set(jnp.sin(pos * div))
    pe = pe.at[:, 1::2].set(jnp.cos(pos * div))
    return pe


def init_params(key, input_features, seq_len, n_heads, n_layers, d_model):
    keys = iter(jax.random.split(key, 4 + 12 * n_layers))

    def nrm(shape, scale):
        return scale * jax.random.normal(next(keys), shape, jnp.float32)

    D = d_model
    params = {
        "conv_w": nrm((D, input_features), 0.2),   # Conv1d weight (D, Fin, 1) squeezed
        "conv_b": nrm((1, D), 0.1),
        "bn_g": 1.0 + nrm((1, D), 0.1),
        "bn_b": nrm((1, D), 0.1),
        "pe": positional_encoding(seq_len, D),
        "blocks": [],
    }
    for _ in range(n_layers):
        params["blocks"].append({
            "wqkv": nrm((3 * D, D), 0.1),          # MHA in_proj_weight
            "bqkv": nrm((1, 3 * D), 0.05),
            "wo": nrm((D, D), 0.1),                # MHA out_proj
            "bo": nrm((1, D), 0.05),
            "ln1_g": 1.0 + nrm((1, D), 0.05),
            "ln1_b": nrm((1, D), 0.05),
            "w1": nrm((D, D), 0.1),                # PositionWiseFeedForward linear_1
            "b1": nrm((1, D), 0.05),
            "w2": nrm((D, D), 0.1),                # PositionWiseFeedForward linear_2
            "b2": nrm((1, D), 0.05),
            "ln2_g": 1.0 + nrm((1, D), 0.05),
            "ln2_b": nrm((1, D), 0.05),
        })
    return params


if __name__ == "__main__":
    B, seq_len, input_features = 2, 16, 12
    d_model, n_heads, n_layers = 32, 4, 2

    key = jax.random.PRNGKey(0)
    kx, kp = jax.random.split(key)
    x = jax.random.normal(kx, (B, seq_len, input_features), jnp.float32)
    params = init_params(kp, input_features, seq_len, n_heads, n_layers, d_model)

    y = encoder_layer_for_sand(x, params, n_heads)
    y = jax.block_until_ready(y)

    assert y.shape == (B, seq_len, d_model)
    assert bool(jnp.all(jnp.isfinite(y)))
    print("KERNEL_OK")
</pallas_src>

<mosaic_0001>
module attributes {stable_mosaic.version = 11 : i64} {
  func.func @sand_fused_kernel(%arg0: i32, %arg1: memref<32x12xf32, #tpu.memory_space<vmem>>, %arg2: memref<12x32xbf16, #tpu.memory_space<vmem>>, %arg3: memref<1x32xf32, #tpu.memory_space<vmem>>, %arg4: memref<1x32xf32, #tpu.memory_space<vmem>>, %arg5: memref<1x32xf32, #tpu.memory_space<vmem>>, %arg6: memref<32x32xf32, #tpu.memory_space<vmem>>, %arg7: memref<1x32x96xbf16, #tpu.memory_space<vmem>>, %arg8: memref<1x1x96xf32, #tpu.memory_space<vmem>>, %arg9: memref<1x32x32xbf16, #tpu.memory_space<vmem>>, %arg10: memref<1x1x32xf32, #tpu.memory_space<vmem>>, %arg11: memref<1x1x32xf32, #tpu.memory_space<vmem>>, %arg12: memref<1x1x32xf32, #tpu.memory_space<vmem>>, %arg13: memref<1x32x32xbf16, #tpu.memory_space<vmem>>, %arg14: memref<1x1x32xf32, #tpu.memory_space<vmem>>, %arg15: memref<1x32x32xbf16, #tpu.memory_space<vmem>>, %arg16: memref<1x1x32xf32, #tpu.memory_space<vmem>>, %arg17: memref<1x1x32xf32, #tpu.memory_space<vmem>>, %arg18: memref<1x1x32xf32, #tpu.memory_space<vmem>>, %arg19: memref<32x32xf32, #tpu.memory_space<vmem>>, %arg20: memref<32x32xf32, #tpu.memory_space<vmem>>) attributes {dimension_semantics = [#tpu.dimension_semantics<arbitrary>], iteration_bounds = array<i64: 2>, scalar_prefetch = 0 : i64, scratch_operands = 1 : i64, tpu.core_type = #tpu.core_type<tc>, window_params = [{pipeline_mode = #tpu.pipeline_mode<synchronous>, transform_indices = @transform_0, window_bounds = array<i64: 32, 12>}, {pipeline_mode = #tpu.pipeline_mode<synchronous>, transform_indices = @transform_1, window_bounds = array<i64: 12, 32>}, {pipeline_mode = #tpu.pipeline_mode<synchronous>, transform_indices = @transform_2, window_bounds = array<i64: 1, 32>}, {pipeline_mode = #tpu.pipeline_mode<synchronous>, transform_indices = @transform_3, window_bounds = array<i64: 1, 32>}, {pipeline_mode = #tpu.pipeline_mode<synchronous>, transform_indices = @transform_4, window_bounds = array<i64: 1, 32>}, {pipeline_mode = #tpu.pipeline_mode<synchronous>, transform_indices = @transform_5, window_bounds = array<i64: 32, 32>}, {transform_indices = @transform_6, window_bounds = array<i64: 1, 32, 96>}, {transform_indices = @transform_7, window_bounds = array<i64: 1, 1, 96>}, {transform_indices = @transform_8, window_bounds = array<i64: 1, 32, 32>}, {transform_indices = @transform_9, window_bounds = array<i64: 1, 1, 32>}, {transform_indices = @transform_10, window_bounds = array<i64: 1, 1, 32>}, {transform_indices = @transform_11, window_bounds = array<i64: 1, 1, 32>}, {transform_indices = @transform_12, window_bounds = array<i64: 1, 32, 32>}, {transform_indices = @transform_13, window_bounds = array<i64: 1, 1, 32>}, {transform_indices = @transform_14, window_bounds = array<i64: 1, 32, 32>}, {transform_indices = @transform_15, window_bounds = array<i64: 1, 1, 32>}, {transform_indices = @transform_16, window_bounds = array<i64: 1, 1, 32>}, {transform_indices = @transform_17, window_bounds = array<i64: 1, 1, 32>}, {pipeline_mode = #tpu.pipeline_mode<synchronous>, transform_indices = @transform_18, window_bounds = array<i64: 32, 32>}]} {
    %c0_i32 = arith.constant 0 : i32
    %0 = arith.cmpi eq, %arg0, %c0_i32 : i32
    %1 = arith.extui %0 : i1 to i32
    %c0_i32_0 = arith.constant 0 : i32
    %2 = arith.cmpi ne, %1, %c0_i32_0 : i32
    scf.if %2 {
      %c0_75 = arith.constant 0 : index
      %c0_76 = arith.constant 0 : index
      %192 = vector.load %arg1[%c0_75, %c0_76] : memref<32x12xf32, #tpu.memory_space<vmem>>, vector<32x12xf32>
      %193 = arith.truncf %192 : vector<32x12xf32> to vector<32x12xbf16>
      %c0_77 = arith.constant 0 : index
      %c0_78 = arith.constant 0 : index
      %194 = vector.load %arg2[%c0_77, %c0_78] : memref<12x32xbf16, #tpu.memory_space<vmem>>, vector<12x32xbf16>
      %cst_79 = arith.constant dense<0.000000e+00> : vector<32x32xf32>
      %195 = tpu.matmul %193, %194, %cst_79 {dimension_numbers = #tpu.dot_dimension_numbers<[1], [0], [0], [1], [0, 0, 1, 1], [], []>} : vector<32x12xbf16>, vector<12x32xbf16>, vector<32x32xf32> -> vector<32x32xf32>
      %c0_80 = arith.constant 0 : index
      %c0_81 = arith.constant 0 : index
      %196 = vector.load %arg3[%c0_80, %c0_81] : memref<1x32xf32, #tpu.memory_space<vmem>>, vector<1x32xf32>
      %197 = vector.broadcast %196 : vector<1x32xf32> to vector<32x32xf32>
      %198 = arith.addf %195, %197 : vector<32x32xf32>
      %cst_82 = arith.constant dense<0.000000e+00> : vector<32xf32>
      %199 = vector.multi_reduction <add>, %198, %cst_82 [0] : vector<32x32xf32> to vector<32xf32>
      %200 = vector.shape_cast %199 : vector<32xf32> to vector<1x32xf32>
      %cst_83 = arith.constant 3.200000e+01 : f32
      %201 = vector.broadcast %cst_83 : f32 to vector<1x32xf32>
      %202 = arith.divf %200, %201 : vector<1x32xf32>
      %203 = vector.broadcast %202 : vector<1x32xf32> to vector<32x32xf32>
      %204 = arith.subf %198, %203 : vector<32x32xf32>
      %205 = arith.mulf %204, %204 : vector<32x32xf32>
      %cst_84 = arith.constant dense<0.000000e+00> : vector<32xf32>
      %206 = vector.multi_reduction <add>, %205, %cst_84 [0] : vector<32x32xf32> to vector<32xf32>
      %207 = vector.shape_cast %206 : vector<32xf32> to vector<1x32xf32>
      %cst_85 = arith.constant 3.200000e+01 : f32
      %208 = vector.broadcast %cst_85 : f32 to vector<1x32xf32>
      %209 = arith.divf %207, %208 : vector<1x32xf32>
      %210 = vector.broadcast %202 : vector<1x32xf32> to vector<32x32xf32>
      %211 = arith.subf %198, %210 : vector<32x32xf32>
      %cst_86 = arith.constant 9.99999974E-6 : f32
      %212 = vector.broadcast %cst_86 : f32 to vector<1x32xf32>
      %213 = arith.addf %209, %212 : vector<1x32xf32>
      %214 = math.rsqrt %213 : vector<1x32xf32>
      %215 = vector.broadcast %214 : vector<1x32xf32> to vector<32x32xf32>
      %216 = arith.mulf %211, %215 : vector<32x32xf32>
      %c0_87 = arith.constant 0 : index
      %c0_88 = arith.constant 0 : index
      %217 = vector.load %arg4[%c0_87, %c0_88] : memref<1x32xf32, #tpu.memory_space<vmem>>, vector<1x32xf32>
      %218 = vector.broadcast %217 : vector<1x32xf32> to vector<32x32xf32>
      %219 = arith.mulf %216, %218 : vector<32x32xf32>
      %c0_89 = arith.constant 0 : index
      %c0_90 = arith.constant 0 : index
      %220 = vector.load %arg5[%c0_89, %c0_90] : memref<1x32xf32, #tpu.memory_space<vmem>>, vector<1x32xf32>
      %221 = vector.broadcast %220 : vector<1x32xf32> to vector<32x32xf32>
      %222 = arith.addf %219, %221 : vector<32x32xf32>
      %cst_91 = arith.constant 0.000000e+00 : f32
      %223 = vector.broadcast %cst_91 : f32 to vector<32x32xf32>
      %224 = arith.maximumf %222, %223 : vector<32x32xf32>
      %c0_92 = arith.constant 0 : index
      %c0_93 = arith.constant 0 : index
      %225 = vector.load %arg6[%c0_92, %c0_93] : memref<32x32xf32, #tpu.memory_space<vmem>>, vector<32x32xf32>
      %226 = arith.addf %224, %225 : vector<32x32xf32>
      %c0_94 = arith.constant 0 : index
      %c0_95 = arith.constant 0 : index
      %227 = vector.load %arg20[%c0_94, %c0_95] : memref<32x32xf32, #tpu.memory_space<vmem>>, vector<32x32xf32>
      tpu.vector_store %arg20[%c0_94, %c0_95], %226 {strides = array<i32>} : memref<32x32xf32, #tpu.memory_space<vmem>>, vector<32x32xf32>,
    } else {
    }
    %c0 = arith.constant 0 : index
    %c0_1 = arith.constant 0 : index
    %3 = vector.load %arg20[%c0, %c0_1] : memref<32x32xf32, #tpu.memory_space<vmem>>, vector<32x32xf32>
    %4 = arith.truncf %3 : vector<32x32xf32> to vector<32x32xbf16>
    %c0_2 = arith.constant 0 : index
    %c0_3 = arith.constant 0 : index
    %c0_4 = arith.constant 0 : index
    %5 = vector.load %arg7[%c0_2, %c0_3, %c0_4] : memref<1x32x96xbf16, #tpu.memory_space<vmem>>, vector<1x32x96xbf16>
    %6 = vector.shape_cast %5 : vector<1x32x96xbf16> to vector<32x96xbf16>
    %cst = arith.constant dense<0.000000e+00> : vector<32x96xf32>
    %7 = tpu.matmul %4, %6, %cst {dimension_numbers = #tpu.dot_dimension_numbers<[1], [0], [0], [1], [0, 0, 1, 1], [], []>} : vector<32x32xbf16>, vector<32x96xbf16>, vector<32x96xf32> -> vector<32x96xf32>
    %c0_5 = arith.constant 0 : index
    %c0_6 = arith.constant 0 : index
    %c0_7 = arith.constant 0 : index
    %8 = vector.load %arg8[%c0_5, %c0_6, %c0_7] : memref<1x1x96xf32, #tpu.memory_space<vmem>>, vector<1x1x96xf32>
    %9 = vector.shape_cast %8 : vector<1x1x96xf32> to vector<1x96xf32>
    %10 = vector.broadcast %9 : vector<1x96xf32> to vector<32x96xf32>
    %11 = arith.addf %7, %10 : vector<32x96xf32>
    %12 = arith.truncf %11 : vector<32x96xf32> to vector<32x96xbf16>
    %c0_8 = arith.constant 0 : index
    %c0_9 = arith.constant 0 : index
    %c0_10 = arith.constant 0 : index
    %13 = vector.load %arg9[%c0_8, %c0_9, %c0_10] : memref<1x32x32xbf16, #tpu.memory_space<vmem>>, vector<1x32x32xbf16>
    %14 = vector.shape_cast %13 : vector<1x32x32xbf16> to vector<32x32xbf16>
    %cst_11 = arith.constant 0.000000e+00 : f32
    %15 = vector.broadcast %cst_11 : f32 to vector<32x32xf32>
    %16 = vector.extract_strided_slice %12 {offsets = [0, 0], sizes = [32, 8], strides = [1, 1]} : vector<32x96xbf16> to vector<32x8xbf16>
    %17 = vector.shape_cast %16 : vector<32x8xbf16> to vector<2x16x8xbf16>
    %18 = vector.extract_strided_slice %12 {offsets = [0, 32], sizes = [32, 8], strides = [1, 1]} : vector<32x96xbf16> to vector<32x8xbf16>
    %19 = vector.shape_cast %18 : vector<32x8xbf16> to vector<2x16x8xbf16>
    %20 = vector.extract_strided_slice %12 {offsets = [0, 64], sizes = [32, 8], strides = [1, 1]} : vector<32x96xbf16> to vector<32x8xbf16>
    %21 = vector.shape_cast %20 : vector<32x8xbf16> to vector<2x16x8xbf16>
    "tpu.trace_start"() <{level = 10 : i32, message = "btd,bsd->bts"}> : () -> ()
    %cst_12 = arith.constant dense<0.000000e+00> : vector<2x16x16xf32>
    %22 = tpu.matmul %17, %19, %cst_12 {dimension_numbers = #tpu.dot_dimension_numbers<[2], [2], [1], [1], [0, 0, 0, 1, 1, 1], [0], [0]>} : vector<2x16x8xbf16>, vector<2x16x8xbf16>, vector<2x16x16xf32> -> vector<2x16x16xf32>
    "tpu.trace_stop"() : () -> ()
    %cst_13 = arith.constant dense<0xFF800000> : vector<2x16xf32>
    %23 = vector.multi_reduction <maximumf>, %22, %cst_13 [2] : vector<2x16x16xf32> to vector<2x16xf32>
    %24 = vector.shape_cast %23 : vector<2x16xf32> to vector<2x16x1xf32>
    %25 = vector.broadcast %24 : vector<2x16x1xf32> to vector<2x16x16xf32>
    %26 = arith.subf %22, %25 : vector<2x16x16xf32>
    %27 = math.exp %26 : vector<2x16x16xf32>
    %cst_14 = arith.constant dense<0.000000e+00> : vector<2x16xf32>
    %28 = vector.multi_reduction <add>, %27, %cst_14 [2] : vector<2x16x16xf32> to vector<2x16xf32>
    %29 = vector.shape_cast %28 : vector<2x16xf32> to vector<2x16x1xf32>
    %30 = tpu.reciprocal %29 {approx = true} : vector<2x16x1xf32> -> vector<2x16x1xf32>
    %31 = vector.broadcast %30 : vector<2x16x1xf32> to vector<2x16x16xf32>
    %32 = arith.mulf %27, %31 : vector<2x16x16xf32>
    %33 = arith.truncf %32 : vector<2x16x16xf32> to vector<2x16x16xbf16>
    "tpu.trace_start"() <{level = 10 : i32, message = "bts,bsd->btd"}> : () -> ()
    %cst_15 = arith.constant dense<0.000000e+00> : vector<2x16x8xf32>
    %34 = tpu.matmul %33, %21, %cst_15 {dimension_numbers = #tpu.dot_dimension_numbers<[2], [1], [1], [2], [0, 0, 0, 1, 1, 2], [0], [0]>} : vector<2x16x16xbf16>, vector<2x16x8xbf16>, vector<2x16x8xf32> -> vector<2x16x8xf32>
    "tpu.trace_stop"() : () -> ()
    %35 = vector.shape_cast %34 : vector<2x16x8xf32> to vector<32x8xf32>
    %36 = arith.truncf %35 : vector<32x8xf32> to vector<32x8xbf16>
    %37 = vector.extract_strided_slice %14 {offsets = [0, 0], sizes = [8, 32], strides = [1, 1]} : vector<32x32xbf16> to vector<8x32xbf16>
    %cst_16 = arith.constant dense<0.000000e+00> : vector<32x32xf32>
    %38 = tpu.matmul %36, %37, %cst_16 {dimension_numbers = #tpu.dot_dimension_numbers<[1], [0], [0], [1], [0, 0, 1, 1], [], []>} : vector<32x8xbf16>, vector<8x32xbf16>, vector<32x32xf32> -> vector<32x32xf32>
    %39 = arith.addf %15, %38 : vector<32x32xf32>
    %40 = vector.extract_strided_slice %12 {offsets = [0, 8], sizes = [32, 8], strides = [1, 1]} : vector<32x96xbf16> to vector<32x8xbf16>
    %41 = vector.shape_cast %40 : vector<32x8xbf16> to vector<2x16x8xbf16>
    %42 = vector.extract_strided_slice %12 {offsets = [0, 40], sizes = [32, 8], strides = [1, 1]} : vector<32x96xbf16> to vector<32x8xbf16>
    %43 = vector.shape_cast %42 : vector<32x8xbf16> to vector<2x16x8xbf16>
    %44 = vector.extract_strided_slice %12 {offsets = [0, 72], sizes = [32, 8], strides = [1, 1]} : vector<32x96xbf16> to vector<32x8xbf16>
    %45 = vector.shape_cast %44 : vector<32x8xbf16> to vector<2x16x8xbf16>
    "tpu.trace_start"() <{level = 10 : i32, message = "btd,bsd->bts"}> : () -> ()
    %cst_17 = arith.constant dense<0.000000e+00> : vector<2x16x16xf32>
    %46 = tpu.matmul %41, %43, %cst_17 {dimension_numbers = #tpu.dot_dimension_numbers<[2], [2], [1], [1], [0, 0, 0, 1, 1, 1], [0], [0]>} : vector<2x16x8xbf16>, vector<2x16x8xbf16>, vector<2x16x16xf32> -> vector<2x16x16xf32>
    "tpu.trace_stop"() : () -> ()
    %cst_18 = arith.constant dense<0xFF800000> : vector<2x16xf32>
    %47 = vector.multi_reduction <maximumf>, %46, %cst_18 [2] : vector<2x16x16xf32> to vector<2x16xf32>
    %48 = vector.shape_cast %47 : vector<2x16xf32> to vector<2x16x1xf32>
    %49 = vector.broadcast %48 : vector<2x16x1xf32> to vector<2x16x16xf32>
    %50 = arith.subf %46, %49 : vector<2x16x16xf32>
    %51 = math.exp %50 : vector<2x16x16xf32>
    %cst_19 = arith.constant dense<0.000000e+00> : vector<2x16xf32>
    %52 = vector.multi_reduction <add>, %51, %cst_19 [2] : vector<2x16x16xf32> to vector<2x16xf32>
    %53 = vector.shape_cast %52 : vector<2x16xf32> to vector<2x16x1xf32>
    %54 = tpu.reciprocal %53 {approx = true} : vector<2x16x1xf32> -> vector<2x16x1xf32>
    %55 = vector.broadcast %54 : vector<2x16x1xf32> to vector<2x16x16xf32>
    %56 = arith.mulf %51, %55 : vector<2x16x16xf32>
    %57 = arith.truncf %56 : vector<2x16x16xf32> to vector<2x16x16xbf16>
    "tpu.trace_start"() <{level = 10 : i32, message = "bts,bsd->btd"}> : () -> ()
    %cst_20 = arith.constant dense<0.000000e+00> : vector<2x16x8xf32>
    %58 = tpu.matmul %57, %45, %cst_20 {dimension_numbers = #tpu.dot_dimension_numbers<[2], [1], [1], [2], [0, 0, 0, 1, 1, 2], [0], [0]>} : vector<2x16x16xbf16>, vector<2x16x8xbf16>, vector<2x16x8xf32> -> vector<2x16x8xf32>
    "tpu.trace_stop"() : () -> ()
    %59 = vector.shape_cast %58 : vector<2x16x8xf32> to vector<32x8xf32>
    %60 = arith.truncf %59 : vector<32x8xf32> to vector<32x8xbf16>
    %61 = vector.extract_strided_slice %14 {offsets = [8, 0], sizes = [8, 32], strides = [1, 1]} : vector<32x32xbf16> to vector<8x32xbf16>
    %cst_21 = arith.constant dense<0.000000e+00> : vector<32x32xf32>
    %62 = tpu.matmul %60, %61, %cst_21 {dimension_numbers = #tpu.dot_dimension_numbers<[1], [0], [0], [1], [0, 0, 1, 1], [], []>} : vector<32x8xbf16>, vector<8x32xbf16>, vector<32x32xf32> -> vector<32x32xf32>
    %63 = arith.addf %39, %62 : vector<32x32xf32>
    %64 = vector.extract_strided_slice %12 {offsets = [0, 16], sizes = [32, 8], strides = [1, 1]} : vector<32x96xbf16> to vector<32x8xbf16>
    %65 = vector.shape_cast %64 : vector<32x8xbf16> to vector<2x16x8xbf16>
    %66 = vector.extract_strided_slice %12 {offsets = [0, 48], sizes = [32, 8], strides = [1, 1]} : vector<32x96xbf16> to vector<32x8xbf16>
    %67 = vector.shape_cast %66 : vector<32x8xbf16> to vector<2x16x8xbf16>
    %68 = vector.extract_strided_slice %12 {offsets = [0, 80], sizes = [32, 8], strides = [1, 1]} : vector<32x96xbf16> to vector<32x8xbf16>
    %69 = vector.shape_cast %68 : vector<32x8xbf16> to vector<2x16x8xbf16>
    "tpu.trace_start"() <{level = 10 : i32, message = "btd,bsd->bts"}> : () -> ()
    %cst_22 = arith.constant dense<0.000000e+00> : vector<2x16x16xf32>
    %70 = tpu.matmul %65, %67, %cst_22 {dimension_numbers = #tpu.dot_dimension_numbers<[2], [2], [1], [1], [0, 0, 0, 1, 1, 1], [0], [0]>} : vector<2x16x8xbf16>, vector<2x16x8xbf16>, vector<2x16x16xf32> -> vector<2x16x16xf32>
    "tpu.trace_stop"() : () -> ()
    %cst_23 = arith.constant dense<0xFF800000> : vector<2x16xf32>
    %71 = vector.multi_reduction <maximumf>, %70, %cst_23 [2] : vector<2x16x16xf32> to vector<2x16xf32>
    %72 = vector.shape_cast %71 : vector<2x16xf32> to vector<2x16x1xf32>
    %73 = vector.broadcast %72 : vector<2x16x1xf32> to vector<2x16x16xf32>
    %74 = arith.subf %70, %73 : vector<2x16x16xf32>
    %75 = math.exp %74 : vector<2x16x16xf32>
    %cst_24 = arith.constant dense<0.000000e+00> : vector<2x16xf32>
    %76 = vector.multi_reduction <add>, %75, %cst_24 [2] : vector<2x16x16xf32> to vector<2x16xf32>
    %77 = vector.shape_cast %76 : vector<2x16xf32> to vector<2x16x1xf32>
    %78 = tpu.reciprocal %77 {approx = true} : vector<2x16x1xf32> -> vector<2x16x1xf32>
    %79 = vector.broadcast %78 : vector<2x16x1xf32> to vector<2x16x16xf32>
    %80 = arith.mulf %75, %79 : vector<2x16x16xf32>
    %81 = arith.truncf %80 : vector<2x16x16xf32> to vector<2x16x16xbf16>
    "tpu.trace_start"() <{level = 10 : i32, message = "bts,bsd->btd"}> : () -> ()
    %cst_25 = arith.constant dense<0.000000e+00> : vector<2x16x8xf32>
    %82 = tpu.matmul %81, %69, %cst_25 {dimension_numbers = #tpu.dot_dimension_numbers<[2], [1], [1], [2], [0, 0, 0, 1, 1, 2], [0], [0]>} : vector<2x16x16xbf16>, vector<2x16x8xbf16>, vector<2x16x8xf32> -> vector<2x16x8xf32>
    "tpu.trace_stop"() : () -> ()
    %83 = vector.shape_cast %82 : vector<2x16x8xf32> to vector<32x8xf32>
    %84 = arith.truncf %83 : vector<32x8xf32> to vector<32x8xbf16>
    %85 = vector.extract_strided_slice %14 {offsets = [16, 0], sizes = [8, 32], strides = [1, 1]} : vector<32x32xbf16> to vector<8x32xbf16>
    %cst_26 = arith.constant dense<0.000000e+00> : vector<32x32xf32>
    %86 = tpu.matmul %84, %85, %cst_26 {dimension_numbers = #tpu.dot_dimension_numbers<[1], [0], [0], [1], [0, 0, 1, 1], [], []>} : vector<32x8xbf16>, vector<8x32xbf16>, vector<32x32xf32> -> vector<32x32xf32>
    %87 = arith.addf %63, %86 : vector<32x32xf32>
    %88 = vector.extract_strided_slice %12 {offsets = [0, 24], sizes = [32, 8], strides = [1, 1]} : vector<32x96xbf16> to vector<32x8xbf16>
    %89 = vector.shape_cast %88 : vector<32x8xbf16> to vector<2x16x8xbf16>
    %90 = vector.extract_strided_slice %12 {offsets = [0, 56], sizes = [32, 8], strides = [1, 1]} : vector<32x96xbf16> to vector<32x8xbf16>
    %91 = vector.shape_cast %90 : vector<32x8xbf16> to vector<2x16x8xbf16>
    %92 = vector.extract_strided_slice %12 {offsets = [0, 88], sizes = [32, 8], strides = [1, 1]} : vector<32x96xbf16> to vector<32x8xbf16>
    %93 = vector.shape_cast %92 : vector<32x8xbf16> to vector<2x16x8xbf16>
    "tpu.trace_start"() <{level = 10 : i32, message = "btd,bsd->bts"}> : () -> ()
    %cst_27 = arith.constant dense<0.000000e+00> : vector<2x16x16xf32>
    %94 = tpu.matmul %89, %91, %cst_27 {dimension_numbers = #tpu.dot_dimension_numbers<[2], [2], [1], [1], [0, 0, 0, 1, 1, 1], [0], [0]>} : vector<2x16x8xbf16>, vector<2x16x8xbf16>, vector<2x16x16xf32> -> vector<2x16x16xf32>
    "tpu.trace_stop"() : () -> ()
    %cst_28 = arith.constant dense<0xFF800000> : vector<2x16xf32>
    %95 = vector.multi_reduction <maximumf>, %94, %cst_28 [2] : vector<2x16x16xf32> to vector<2x16xf32>
    %96 = vector.shape_cast %95 : vector<2x16xf32> to vector<2x16x1xf32>
    %97 = vector.broadcast %96 : vector<2x16x1xf32> to vector<2x16x16xf32>
    %98 = arith.subf %94, %97 : vector<2x16x16xf32>
    %99 = math.exp %98 : vector<2x16x16xf32>
    %cst_29 = arith.constant dense<0.000000e+00> : vector<2x16xf32>
    %100 = vector.multi_reduction <add>, %99, %cst_29 [2] : vector<2x16x16xf32> to vector<2x16xf32>
    %101 = vector.shape_cast %100 : vector<2x16xf32> to vector<2x16x1xf32>
    %102 = tpu.reciprocal %101 {approx = true} : vector<2x16x1xf32> -> vector<2x16x1xf32>
    %103 = vector.broadcast %102 : vector<2x16x1xf32> to vector<2x16x16xf32>
    %104 = arith.mulf %99, %103 : vector<2x16x16xf32>
    %105 = arith.truncf %104 : vector<2x16x16xf32> to vector<2x16x16xbf16>
    "tpu.trace_start"() <{level = 10 : i32, message = "bts,bsd->btd"}> : () -> ()
    %cst_30 = arith.constant dense<0.000000e+00> : vector<2x16x8xf32>
    %106 = tpu.matmul %105, %93, %cst_30 {dimension_numbers = #tpu.dot_dimension_numbers<[2], [1], [1], [2], [0, 0, 0, 1, 1, 2], [0], [0]>} : vector<2x16x16xbf16>, vector<2x16x8xbf16>, vector<2x16x8xf32> -> vector<2x16x8xf32>
    "tpu.trace_stop"() : () -> ()
    %107 = vector.shape_cast %106 : vector<2x16x8xf32> to vector<32x8xf32>
    %108 = arith.truncf %107 : vector<32x8xf32> to vector<32x8xbf16>
    %109 = vector.extract_strided_slice %14 {offsets = [24, 0], sizes = [8, 32], strides = [1, 1]} : vector<32x32xbf16> to vector<8x32xbf16>
    %cst_31 = arith.constant dense<0.000000e+00> : vector<32x32xf32>
    %110 = tpu.matmul %108, %109, %cst_31 {dimension_numbers = #tpu.dot_dimension_numbers<[1], [0], [0], [1], [0, 0, 1, 1], [], []>} : vector<32x8xbf16>, vector<8x32xbf16>, vector<32x32xf32> -> vector<32x32xf32>
    %111 = arith.addf %87, %110 : vector<32x32xf32>
    %c0_32 = arith.constant 0 : index
    %c0_33 = arith.constant 0 : index
    %c0_34 = arith.constant 0 : index
    %112 = vector.load %arg10[%c0_32, %c0_33, %c0_34] : memref<1x1x32xf32, #tpu.memory_space<vmem>>, vector<1x1x32xf32>
    %113 = vector.shape_cast %112 : vector<1x1x32xf32> to vector<1x32xf32>
    %114 = vector.broadcast %113 : vector<1x32xf32> to vector<32x32xf32>
    %115 = arith.addf %111, %114 : vector<32x32xf32>
    %116 = arith.addf %3, %115 : vector<32x32xf32>
    %c0_35 = arith.constant 0 : index
    %c0_36 = arith.constant 0 : index
    %c0_37 = arith.constant 0 : index
    %117 = vector.load %arg11[%c0_35, %c0_36, %c0_37] : memref<1x1x32xf32, #tpu.memory_space<vmem>>, vector<1x1x32xf32>
    %118 = vector.shape_cast %117 : vector<1x1x32xf32> to vector<1x32xf32>
    %c0_38 = arith.constant 0 : index
    %c0_39 = arith.constant 0 : index
    %c0_40 = arith.constant 0 : index
    %119 = vector.load %arg12[%c0_38, %c0_39, %c0_40] : memref<1x1x32xf32, #tpu.memory_space<vmem>>, vector<1x1x32xf32>
    %120 = vector.shape_cast %119 : vector<1x1x32xf32> to vector<1x32xf32>
    %cst_41 = arith.constant dense<0.000000e+00> : vector<32xf32>
    %121 = vector.multi_reduction <add>, %116, %cst_41 [1] : vector<32x32xf32> to vector<32xf32>
    %122 = vector.shape_cast %121 : vector<32xf32> to vector<32x1xf32>
    %cst_42 = arith.constant 3.200000e+01 : f32
    %123 = vector.broadcast %cst_42 : f32 to vector<32x1xf32>
    %124 = arith.divf %122, %123 : vector<32x1xf32>
    %125 = vector.broadcast %124 : vector<32x1xf32> to vector<32x32xf32>
    %126 = arith.subf %116, %125 : vector<32x32xf32>
    %127 = arith.mulf %126, %126 : vector<32x32xf32>
    %cst_43 = arith.constant dense<0.000000e+00> : vector<32xf32>
    %128 = vector.multi_reduction <add>, %127, %cst_43 [1] : vector<32x32xf32> to vector<32xf32>
    %129 = vector.shape_cast %128 : vector<32xf32> to vector<32x1xf32>
    %cst_44 = arith.constant 3.200000e+01 : f32
    %130 = vector.broadcast %cst_44 : f32 to vector<32x1xf32>
    %131 = arith.divf %129, %130 : vector<32x1xf32>
    %132 = vector.broadcast %124 : vector<32x1xf32> to vector<32x32xf32>
    %133 = arith.subf %116, %132 : vector<32x32xf32>
    %cst_45 = arith.constant 9.99999974E-6 : f32
    %134 = vector.broadcast %cst_45 : f32 to vector<32x1xf32>
    %135 = arith.addf %131, %134 : vector<32x1xf32>
    %136 = math.rsqrt %135 : vector<32x1xf32>
    %137 = vector.broadcast %136 : vector<32x1xf32> to vector<32x32xf32>
    %138 = arith.mulf %133, %137 : vector<32x32xf32>
    %139 = vector.broadcast %118 : vector<1x32xf32> to vector<32x32xf32>
    %140 = arith.mulf %138, %139 : vector<32x32xf32>
    %141 = vector.broadcast %120 : vector<1x32xf32> to vector<32x32xf32>
    %142 = arith.addf %140, %141 : vector<32x32xf32>
    %143 = arith.truncf %142 : vector<32x32xf32> to vector<32x32xbf16>
    %c0_46 = arith.constant 0 : index
    %c0_47 = arith.constant 0 : index
    %c0_48 = arith.constant 0 : index
    %144 = vector.load %arg13[%c0_46, %c0_47, %c0_48] : memref<1x32x32xbf16, #tpu.memory_space<vmem>>, vector<1x32x32xbf16>
    %145 = vector.shape_cast %144 : vector<1x32x32xbf16> to vector<32x32xbf16>
    %cst_49 = arith.constant dense<0.000000e+00> : vector<32x32xf32>
    %146 = tpu.matmul %143, %145, %cst_49 {dimension_numbers = #tpu.dot_dimension_numbers<[1], [0], [0], [1], [0, 0, 1, 1], [], []>} : vector<32x32xbf16>, vector<32x32xbf16>, vector<32x32xf32> -> vector<32x32xf32>
    %c0_50 = arith.constant 0 : index
    %c0_51 = arith.constant 0 : index
    %c0_52 = arith.constant 0 : index
    %147 = vector.load %arg14[%c0_50, %c0_51, %c0_52] : memref<1x1x32xf32, #tpu.memory_space<vmem>>, vector<1x1x32xf32>
    %148 = vector.shape_cast %147 : vector<1x1x32xf32> to vector<1x32xf32>
    %149 = vector.broadcast %148 : vector<1x32xf32> to vector<32x32xf32>
    %150 = arith.addf %146, %149 : vector<32x32xf32>
    %cst_53 = arith.constant 0.000000e+00 : f32
    %151 = vector.broadcast %cst_53 : f32 to vector<32x32xf32>
    %152 = arith.maximumf %150, %151 : vector<32x32xf32>
    %153 = arith.truncf %152 : vector<32x32xf32> to vector<32x32xbf16>
    %c0_54 = arith.constant 0 : index
    %c0_55 = arith.constant 0 : index
    %c0_56 = arith.constant 0 : index
    %154 = vector.load %arg15[%c0_54, %c0_55, %c0_56] : memref<1x32x32xbf16, #tpu.memory_space<vmem>>, vector<1x32x32xbf16>
    %155 = vector.shape_cast %154 : vector<1x32x32xbf16> to vector<32x32xbf16>
    %cst_57 = arith.constant dense<0.000000e+00> : vector<32x32xf32>
    %156 = tpu.matmul %153, %155, %cst_57 {dimension_numbers = #tpu.dot_dimension_numbers<[1], [0], [0], [1], [0, 0, 1, 1], [], []>} : vector<32x32xbf16>, vector<32x32xbf16>, vector<32x32xf32> -> vector<32x32xf32>
    %c0_58 = arith.constant 0 : index
    %c0_59 = arith.constant 0 : index
    %c0_60 = arith.constant 0 : index
    %157 = vector.load %arg16[%c0_58, %c0_59, %c0_60] : memref<1x1x32xf32, #tpu.memory_space<vmem>>, vector<1x1x32xf32>
    %158 = vector.shape_cast %157 : vector<1x1x32xf32> to vector<1x32xf32>
    %159 = vector.broadcast %158 : vector<1x32xf32> to vector<32x32xf32>
    %160 = arith.addf %156, %159 : vector<32x32xf32>
    %161 = arith.addf %142, %160 : vector<32x32xf32>
    %c0_61 = arith.constant 0 : index
    %c0_62 = arith.constant 0 : index
    %c0_63 = arith.constant 0 : index
    %162 = vector.load %arg17[%c0_61, %c0_62, %c0_63] : memref<1x1x32xf32, #tpu.memory_space<vmem>>, vector<1x1x32xf32>
    %163 = vector.shape_cast %162 : vector<1x1x32xf32> to vector<1x32xf32>
    %c0_64 = arith.constant 0 : index
    %c0_65 = arith.constant 0 : index
    %c0_66 = arith.constant 0 : index
    %164 = vector.load %arg18[%c0_64, %c0_65, %c0_66] : memref<1x1x32xf32, #tpu.memory_space<vmem>>, vector<1x1x32xf32>
    %165 = vector.shape_cast %164 : vector<1x1x32xf32> to vector<1x32xf32>
    %cst_67 = arith.constant dense<0.000000e+00> : vector<32xf32>
    %166 = vector.multi_reduction <add>, %161, %cst_67 [1] : vector<32x32xf32> to vector<32xf32>
    %167 = vector.shape_cast %166 : vector<32xf32> to vector<32x1xf32>
    %cst_68 = arith.constant 3.200000e+01 : f32
    %168 = vector.broadcast %cst_68 : f32 to vector<32x1xf32>
    %169 = arith.divf %167, %168 : vector<32x1xf32>
    %170 = vector.broadcast %169 : vector<32x1xf32> to vector<32x32xf32>
    %171 = arith.subf %161, %170 : vector<32x32xf32>
    %172 = arith.mulf %171, %171 : vector<32x32xf32>
    %cst_69 = arith.constant dense<0.000000e+00> : vector<32xf32>
    %173 = vector.multi_reduction <add>, %172, %cst_69 [1] : vector<32x32xf32> to vector<32xf32>
    %174 = vector.shape_cast %173 : vector<32xf32> to vector<32x1xf32>
    %cst_70 = arith.constant 3.200000e+01 : f32
    %175 = vector.broadcast %cst_70 : f32 to vector<32x1xf32>
    %176 = arith.divf %174, %175 : vector<32x1xf32>
    %177 = vector.broadcast %169 : vector<32x1xf32> to vector<32x32xf32>
    %178 = arith.subf %161, %177 : vector<32x32xf32>
    %cst_71 = arith.constant 9.99999974E-6 : f32
    %179 = vector.broadcast %cst_71 : f32 to vector<32x1xf32>
    %180 = arith.addf %176, %179 : vector<32x1xf32>
    %181 = math.rsqrt %180 : vector<32x1xf32>
    %182 = vector.broadcast %181 : vector<32x1xf32> to vector<32x32xf32>
    %183 = arith.mulf %178, %182 : vector<32x32xf32>
    %184 = vector.broadcast %163 : vector<1x32xf32> to vector<32x32xf32>
    %185 = arith.mulf %183, %184 : vector<32x32xf32>
    %186 = vector.broadcast %165 : vector<1x32xf32> to vector<32x32xf32>
    %187 = arith.addf %185, %186 : vector<32x32xf32>
    %c0_72 = arith.constant 0 : index
    %c0_73 = arith.constant 0 : index
    %188 = vector.load %arg20[%c0_72, %c0_73] : memref<32x32xf32, #tpu.memory_space<vmem>>, vector<32x32xf32>
    tpu.vector_store %arg20[%c0_72, %c0_73], %187 {strides = array<i32>} : memref<32x32xf32, #tpu.memory_space<vmem>>, vector<32x32xf32>,
    %c1_i32 = arith.constant 1 : i32
    %189 = arith.cmpi eq, %arg0, %c1_i32 : i32
    %190 = arith.extui %189 : i1 to i32
    %c0_i32_74 = arith.constant 0 : i32
    %191 = arith.cmpi ne, %190, %c0_i32_74 : i32
    scf.if %191 {
      %c0_75 = arith.constant 0 : index
      %c0_76 = arith.constant 0 : index
      %192 = vector.load %arg19[%c0_75, %c0_76] : memref<32x32xf32, #tpu.memory_space<vmem>>, vector<32x32xf32>
      tpu.vector_store %arg19[%c0_75, %c0_76], %187 {strides = array<i32>} : memref<32x32xf32, #tpu.memory_space<vmem>>, vector<32x32xf32>,
    } else {
    }
    return
  }
  func.func @transform_0(%arg0: i32) -> (i32, i32) {
    %c0_i32 = arith.constant 0 : i32
    %c0_i32_0 = arith.constant 0 : i32
    %c0_i32_1 = arith.constant 0 : i32
    return %c0_i32, %c0_i32_0 : i32, i32
  }
  func.func @transform_1(%arg0: i32) -> (i32, i32) {
    %c0_i32 = arith.constant 0 : i32
    %c0_i32_0 = arith.constant 0 : i32
    %c0_i32_1 = arith.constant 0 : i32
    return %c0_i32, %c0_i32_0 : i32, i32
  }
  func.func @transform_2(%arg0: i32) -> (i32, i32) {
    %c0_i32 = arith.constant 0 : i32
    %c0_i32_0 = arith.constant 0 : i32
    %c0_i32_1 = arith.constant 0 : i32
    return %c0_i32, %c0_i32_0 : i32, i32
  }
  func.func @transform_3(%arg0: i32) -> (i32, i32) {
    %c0_i32 = arith.constant 0 : i32
    %c0_i32_0 = arith.constant 0 : i32
    %c0_i32_1 = arith.constant 0 : i32
    return %c0_i32, %c0_i32_0 : i32, i32
  }
  func.func @transform_4(%arg0: i32) -> (i32, i32) {
    %c0_i32 = arith.constant 0 : i32
    %c0_i32_0 = arith.constant 0 : i32
    %c0_i32_1 = arith.constant 0 : i32
    return %c0_i32, %c0_i32_0 : i32, i32
  }
  func.func @transform_5(%arg0: i32) -> (i32, i32) {
    %c0_i32 = arith.constant 0 : i32
    %c0_i32_0 = arith.constant 0 : i32
    %c0_i32_1 = arith.constant 0 : i32
    return %c0_i32, %c0_i32_0 : i32, i32
  }
  func.func @transform_6(%arg0: i32) -> (i32, i32, i32) {
    %c0_i32 = arith.constant 0 : i32
    %c0_i32_0 = arith.constant 0 : i32
    %c0_i32_1 = arith.constant 0 : i32
    return %arg0, %c0_i32, %c0_i32_0 : i32, i32, i32
  }
  func.func @transform_7(%arg0: i32) -> (i32, i32, i32) {
    %c0_i32 = arith.constant 0 : i32
    %c0_i32_0 = arith.constant 0 : i32
    %c0_i32_1 = arith.constant 0 : i32
    return %arg0, %c0_i32, %c0_i32_0 : i32, i32, i32
  }
  func.func @transform_8(%arg0: i32) -> (i32, i32, i32) {
    %c0_i32 = arith.constant 0 : i32
    %c0_i32_0 = arith.constant 0 : i32
    %c0_i32_1 = arith.constant 0 : i32
    return %arg0, %c0_i32, %c0_i32_0 : i32, i32, i32
  }
  func.func @transform_9(%arg0: i32) -> (i32, i32, i32) {
    %c0_i32 = arith.constant 0 : i32
    %c0_i32_0 = arith.constant 0 : i32
    %c0_i32_1 = arith.constant 0 : i32
    return %arg0, %c0_i32, %c0_i32_0 : i32, i32, i32
  }
  func.func @transform_10(%arg0: i32) -> (i32, i32, i32) {
    %c0_i32 = arith.constant 0 : i32
    %c0_i32_0 = arith.constant 0 : i32
    %c0_i32_1 = arith.constant 0 : i32
    return %arg0, %c0_i32, %c0_i32_0 : i32, i32, i32
  }
  func.func @transform_11(%arg0: i32) -> (i32, i32, i32) {
    %c0_i32 = arith.constant 0 : i32
    %c0_i32_0 = arith.constant 0 : i32
    %c0_i32_1 = arith.constant 0 : i32
    return %arg0, %c0_i32, %c0_i32_0 : i32, i32, i32
  }
  func.func @transform_12(%arg0: i32) -> (i32, i32, i32) {
    %c0_i32 = arith.constant 0 : i32
    %c0_i32_0 = arith.constant 0 : i32
    %c0_i32_1 = arith.constant 0 : i32
    return %arg0, %c0_i32, %c0_i32_0 : i32, i32, i32
  }
  func.func @transform_13(%arg0: i32) -> (i32, i32, i32) {
    %c0_i32 = arith.constant 0 : i32
    %c0_i32_0 = arith.constant 0 : i32
    %c0_i32_1 = arith.constant 0 : i32
    return %arg0, %c0_i32, %c0_i32_0 : i32, i32, i32
  }
  func.func @transform_14(%arg0: i32) -> (i32, i32, i32) {
    %c0_i32 = arith.constant 0 : i32
    %c0_i32_0 = arith.constant 0 : i32
    %c0_i32_1 = arith.constant 0 : i32
    return %arg0, %c0_i32, %c0_i32_0 : i32, i32, i32
  }
  func.func @transform_15(%arg0: i32) -> (i32, i32, i32) {
    %c0_i32 = arith.constant 0 : i32
    %c0_i32_0 = arith.constant 0 : i32
    %c0_i32_1 = arith.constant 0 : i32
    return %arg0, %c0_i32, %c0_i32_0 : i32, i32, i32
  }
  func.func @transform_16(%arg0: i32) -> (i32, i32, i32) {
    %c0_i32 = arith.constant 0 : i32
    %c0_i32_0 = arith.constant 0 : i32
    %c0_i32_1 = arith.constant 0 : i32
    return %arg0, %c0_i32, %c0_i32_0 : i32, i32, i32
  }
  func.func @transform_17(%arg0: i32) -> (i32, i32, i32) {
    %c0_i32 = arith.constant 0 : i32
    %c0_i32_0 = arith.constant 0 : i32
    %c0_i32_1 = arith.constant 0 : i32
    return %arg0, %c0_i32, %c0_i32_0 : i32, i32, i32
  }
  func.func @transform_18(%arg0: i32) -> (i32, i32) {
    %c0_i32 = arith.constant 0 : i32
    %c0_i32_0 = arith.constant 0 : i32
    %c0_i32_1 = arith.constant 0 : i32
    return %c0_i32, %c0_i32_0 : i32, i32
  }
}

</mosaic_0001>

<llo_original>
// kernel: tpu_custom_call.1
$region0: #{tpu_custom_call.1}
  #allocation0 [shape = 'u32[]', space=smem, size = 0x4, offset = 0x4, fixed_abs, tag = 'smem constant byte address 0x4 - core index']
  #allocation1 [shape = 'u32[72,128]{1,0:T(1,128)}', space=vmem, size = 0x9000, scoped, tag = 'internal scratch']
  #allocation2 [shape = 'f32[32,32]{1,0:T(8,128)}', space=vmem, size = 0x4000, scoped, tag = 'scratch operand']
  %s0 = inlined_call_operand.vmem [shape: f32[32,12], index: 0, kind: input, shape index: {}]
  %s1 = inlined_call_operand.vmem [shape: bf16[12,32], index: 1, kind: input, shape index: {}]
  %s2 = inlined_call_operand.hbm [shape: f32[1,32], index: 2, kind: input, shape index: {}]
  %s3 = inlined_call_operand.hbm [shape: f32[1,32], index: 3, kind: input, shape index: {}]
  %s4 = inlined_call_operand.hbm [shape: f32[1,32], index: 4, kind: input, shape index: {}]
  %s5 = inlined_call_operand.vmem [shape: f32[32,32], index: 5, kind: input, shape index: {}]
  %s6 = inlined_call_operand.hbm [shape: bf16[2,32,96], index: 6, kind: input, shape index: {}]
  %s7 = inlined_call_operand.vmem [shape: f32[2,1,96], index: 7, kind: input, shape index: {}]
  %s8 = inlined_call_operand.hbm [shape: bf16[2,32,32], index: 8, kind: input, shape index: {}]
  %s9 = inlined_call_operand.vmem [shape: f32[2,1,32], index: 9, kind: input, shape index: {}]
  %s10 = inlined_call_operand.vmem [shape: f32[2,1,32], index: 10, kind: input, shape index: {}]
  %s11 = inlined_call_operand.vmem [shape: f32[2,1,32], index: 11, kind: input, shape index: {}]
  %s12 = inlined_call_operand.hbm [shape: bf16[2,32,32], index: 12, kind: input, shape index: {}]
  %s13 = inlined_call_operand.vmem [shape: f32[2,1,32], index: 13, kind: input, shape index: {}]
  %s14 = inlined_call_operand.hbm [shape: bf16[2,32,32], index: 14, kind: input, shape index: {}]
  %s15 = inlined_call_operand.vmem [shape: f32[2,1,32], index: 15, kind: input, shape index: {}]
  %s16 = inlined_call_operand.vmem [shape: f32[2,1,32], index: 16, kind: input, shape index: {}]
  %s17 = inlined_call_operand.vmem [shape: f32[2,1,32], index: 17, kind: input, shape index: {}]
  %s18 = inlined_call_operand.hbm [shape: f32[32,32], index: 18, kind: output, shape index: {}]
  %s19 = sld [smem:[#allocation0]]
  $region141: #{tpu_custom_call.1} parent=0
    _
  %s21 = ssub.s32 1, %s19
  %s22 = scalar_select 0, %s21, %s19
  $region1: #{tpu_custom_call.1} parent=0
    #allocation3 [shape = 'u8[512]{0}', space=vmem, size = 0x400, scoped, tag = 'input window, operand 2, single buffered']
    #allocation4 [shape = 's32[2]{0}', space=sflag, size = 0x8, scoped, tag = 'scoped memory for tpu_custom_call.1']
    #allocation5 [shape = 's32[2]{0}', space=sflag, size = 0x8, scoped, tag = 'scoped memory for tpu_custom_call.1']
    #allocation6 [shape = 'u8[512]{0}', space=vmem, size = 0x400, scoped, tag = 'input window, operand 3, single buffered']
    #allocation7 [shape = 's32[1]{0}', space=sflag, size = 0x4, scoped, tag = 'scoped memory for tpu_custom_call.1']
    #allocation8 [shape = 'u8[512]{0}', space=vmem, size = 0x400, scoped, tag = 'input window, operand 4, single buffered']
    #allocation9 [shape = 'u8[16384]{0}', space=vmem, size = 0x4000, scoped, tag = 'input window, operand 6']
    #allocation10 [shape = 's32[2]{0}', space=sflag, size = 0x8, scoped, tag = 'scoped memory for tpu_custom_call.1']
    #allocation11 [shape = 'u8[16384]{0}', space=vmem, size = 0x4000, scoped, tag = 'input window, operand 8']
    #allocation12 [shape = 'u8[16384]{0}', space=vmem, size = 0x4000, scoped, tag = 'input window, operand 12']
    #allocation13 [shape = 's32[2]{0}', space=sflag, size = 0x8, scoped, tag = 'scoped memory for tpu_custom_call.1']
    #allocation14 [shape = 'u8[16384]{0}', space=vmem, size = 0x4000, scoped, tag = 'input window, operand 14']
    #allocation15 [shape = 'u8[16384]{0}', space=vmem, size = 0x4000, scoped, tag = 'output window, operand 0, single buffered']
    %23 = vsyncpa [#allocation4], 0
    %24 = vsyncpa [#allocation7], 0
    %25 = vsyncpa [#allocation10], 0
    %s26 = scalar_lea.sflag [#allocation10], 1
    %27 = vsyncpa %s26, 0
    %28 = vsyncpa [#allocation13], 0
    %s29 = scalar_lea.sflag [#allocation13], 1
    %30 = vsyncpa %s29, 0
    %31 = vsyncpa [#allocation5], 0
    loop: start=0, step=1, limit=4
    $region2: #{tpu_custom_call.1} parent=1 // loop_pre_header
      _
    $region3: #{tpu_custom_call.1} parent=1 // loop_header
      %s33 = sphi 0, %s37
      %p34 = scmp.ge.s32.totalorder %s33, 4
      %s41 = sphi 0, %s41
      %s43 = sphi 0, %s41
      %s44 = sphi 0, %s43
      %s58 = sphi 0, %s44
      %s62 = sphi 0, %s62
      %s64 = sphi 0, %s62
      %s65 = sphi 0, %s64
      %s79 = sphi 0, %s65
      %s83 = sphi 0, %s83
      %s85 = sphi 0, %s83
      %s86 = sphi 0, %s85
      %s100 = sphi 0, %s86
      %s104 = sphi 0, %s104
      %s106 = sphi 0, %s104
      %s107 = sphi 0, %s106
      %s121 = sphi 0, %s107
      %s125 = sphi 0, %s125
      %s127 = sphi 0, %s125
      %s128 = sphi 0, %s127
      %s142 = sphi 0, %s128
      %s146 = sphi 0, %s146
      %s148 = sphi 0, %s146
      %s149 = sphi 0, %s148
      %s163 = sphi 0, %s149
      %s169 = sphi 0, %s171
      %s172 = sphi 0, %s169
      %s173 = sphi 0, %s172
      %s189 = sphi 0, %s173
      %s195 = sphi 0, %s197
      %s198 = sphi 0, %s195
      %s199 = sphi 0, %s198
      %s215 = sphi 0, %s199
      %s221 = sphi 0, %s223
      %s224 = sphi 0, %s221
      %s225 = sphi 0, %s224
      %s241 = sphi 0, %s225
      %s247 = sphi 0, %s249
      %s250 = sphi 0, %s247
      %s251 = sphi 0, %s250
      %s267 = sphi 0, %s251
      %s273 = sphi 0, %s275
      %s276 = sphi 0, %s273
      %s277 = sphi 0, %s276
      %s293 = sphi 0, %s277
      %s299 = sphi 0, %s301
      %s302 = sphi 0, %s299
      %s303 = sphi 0, %s302
      %s319 = sphi 0, %s303
      %s325 = sphi 0, %s327
      %s328 = sphi 0, %s325
      %s329 = sphi 0, %s328
      %s345 = sphi 0, %s329
      %s351 = sphi 0, %s353
      %s354 = sphi 0, %s351
      %s355 = sphi 0, %s354
      %s371 = sphi 0, %s355
      %s377 = sphi 0, %s379
      %s380 = sphi 0, %s377
      %s381 = sphi 0, %s380
      %s397 = sphi 0, %s381
      %s403 = sphi 0, %s405
      %s406 = sphi 0, %s403
      %s407 = sphi 0, %s406
      %s423 = sphi 0, %s407
      %s429 = sphi 0, %s431
      %s432 = sphi 0, %s429
      %s433 = sphi 0, %s432
      %s449 = sphi 0, %s433
      %s455 = sphi 0, %s457
      %s458 = sphi 0, %s455
      %s459 = sphi 0, %s458
      %s475 = sphi 0, %s459
      %s479 = sphi 0, %s479
      %s481 = sphi 0, %s479
      %s482 = sphi 0, %s481
      %s496 = sphi 0, %s482
    $region4: #{tpu_custom_call.1} parent=1 // loop_header_branch
      %36 = sbr.rel (%p34) target = $region8
    $region5: #{tpu_custom_call.1} parent=1 // loop_body
      %s38 = ssub.s32 %s33, 1
      %s39 = ssub.s32 %s33, 2
      %s40 = sadd.s32 %s33, 1
      %s42 = sadd.s32 %s41, 1
      %p45 = scmp.eq.s32.totalorder %s33, 1
      %p46 = scmp.ne.s32.totalorder %s41, %s43
      %p47 = scmp.eq.s32.totalorder %s33, 0
      %p48 = por %p46, %p47
      %p49 = scmp.ne.s32.totalorder %s41, %s43
      %p50 = scmp.eq.s32.totalorder %s38, 1
      %p51 = por %p49, %p50
      %p52 = scmp.ne.s32.totalorder %s43, %s44
      %p53 = scmp.eq.s32.totalorder %s38, 0
      %p54 = por %p52, %p53
      %p55 = scmp.ne.s32.totalorder %s43, %s44
      %p56 = scmp.eq.s32.totalorder %s39, 1
      %p57 = por %p55, %p56
      %p59 = scmp.ne.s32.totalorder %s44, %s58
      %p60 = scmp.eq.s32.totalorder %s39, 0
      %p61 = por %p59, %p60
      %s63 = sadd.s32 %s62, 1
      %p66 = scmp.eq.s32.totalorder %s33, 1
      %p67 = scmp.ne.s32.totalorder %s62, %s64
      %p68 = scmp.eq.s32.totalorder %s33, 0
      %p69 = por %p67, %p68
      %p70 = scmp.ne.s32.totalorder %s62, %s64
      %p71 = scmp.eq.s32.totalorder %s38, 1
      %p72 = por %p70, %p71
      %p73 = scmp.ne.s32.totalorder %s64, %s65
      %p74 = scmp.eq.s32.totalorder %s38, 0
      %p75 = por %p73, %p74
      %p76 = scmp.ne.s32.totalorder %s64, %s65
      %p77 = scmp.eq.s32.totalorder %s39, 1
      %p78 = por %p76, %p77
      %p80 = scmp.ne.s32.totalorder %s65, %s79
      %p81 = scmp.eq.s32.totalorder %s39, 0
      %p82 = por %p80, %p81
      %s84 = sadd.s32 %s83, 1
      %p87 = scmp.eq.s32.totalorder %s33, 1
      %p88 = scmp.ne.s32.totalorder %s83, %s85
      %p89 = scmp.eq.s32.totalorder %s33, 0
      %p90 = por %p88, %p89
      %p91 = scmp.ne.s32.totalorder %s83, %s85
      %p92 = scmp.eq.s32.totalorder %s38, 1
      %p93 = por %p91, %p92
      %p94 = scmp.ne.s32.totalorder %s85, %s86
      %p95 = scmp.eq.s32.totalorder %s38, 0
      %p96 = por %p94, %p95
      %p97 = scmp.ne.s32.totalorder %s85, %s86
      %p98 = scmp.eq.s32.totalorder %s39, 1
      %p99 = por %p97, %p98
      %p101 = scmp.ne.s32.totalorder %s86, %s100
      %p102 = scmp.eq.s32.totalorder %s39, 0
      %p103 = por %p101, %p102
      %s105 = sadd.s32 %s104, 1
      %p108 = scmp.eq.s32.totalorder %s33, 1
      %p109 = scmp.ne.s32.totalorder %s104, %s106
      %p110 = scmp.eq.s32.totalorder %s33, 0
      %p111 = por %p109, %p110
      %p112 = scmp.ne.s32.totalorder %s104, %s106
      %p113 = scmp.eq.s32.totalorder %s38, 1
      %p114 = por %p112, %p113
      %p115 = scmp.ne.s32.totalorder %s106, %s107
      %p116 = scmp.eq.s32.totalorder %s38, 0
      %p117 = por %p115, %p116
      %p118 = scmp.ne.s32.totalorder %s106, %s107
      %p119 = scmp.eq.s32.totalorder %s39, 1
      %p120 = por %p118, %p119
      %p122 = scmp.ne.s32.totalorder %s107, %s121
      %p123 = scmp.eq.s32.totalorder %s39, 0
      %p124 = por %p122, %p123
      %s126 = sadd.s32 %s125, 1
      %p129 = scmp.eq.s32.totalorder %s33, 1
      %p130 = scmp.ne.s32.totalorder %s125, %s127
      %p131 = scmp.eq.s32.totalorder %s33, 0
      %p132 = por %p130, %p131
      %p133 = scmp.ne.s32.totalorder %s125, %s127
      %p134 = scmp.eq.s32.totalorder %s38, 1
      %p135 = por %p133, %p134
      %p136 = scmp.ne.s32.totalorder %s127, %s128
      %p137 = scmp.eq.s32.totalorder %s38, 0
      %p138 = por %p136, %p137
      %p139 = scmp.ne.s32.totalorder %s127, %s128
      %p140 = scmp.eq.s32.totalorder %s39, 1
      %p141 = por %p139, %p140
      %p143 = scmp.ne.s32.totalorder %s128, %s142
      %p144 = scmp.eq.s32.totalorder %s39, 0
      %p145 = por %p143, %p144
      %s147 = sadd.s32 %s146, 1
      %p150 = scmp.eq.s32.totalorder %s33, 1
      %p151 = scmp.ne.s32.totalorder %s146, %s148
      %p152 = scmp.eq.s32.totalorder %s33, 0
      %p153 = por %p151, %p152
      %p154 = scmp.ne.s32.totalorder %s146, %s148
      %p155 = scmp.eq.s32.totalorder %s38, 1
      %p156 = por %p154, %p155
      %p157 = scmp.ne.s32.totalorder %s148, %s149
      %p158 = scmp.eq.s32.totalorder %s38, 0
      %p159 = por %p157, %p158
      %p160 = scmp.ne.s32.totalorder %s148, %s149
      %p161 = scmp.eq.s32.totalorder %s39, 1
      %p162 = por %p160, %p161
      %p164 = scmp.ne.s32.totalorder %s149, %s163
      %p165 = scmp.eq.s32.totalorder %s39, 0
      %p166 = por %p164, %p165
      %s167 = ssub.s32 %s33, %s40
      %p168 = scmp.eq.s32.totalorder %s167, 0
      %s170 = sadd.s32 %s169, 1
      %s171 = scalar_select %p168, %s169, %s170
      %p174 = pneg %p168
      %p175 = scmp.eq.s32.totalorder %s33, 1
      %p176 = por %p174, %p175
      %p177 = scmp.ne.s32.totalorder %s169, %s172
      %p178 = scmp.eq.s32.totalorder %s33, 0
      %p179 = por %p177, %p178
      %p180 = scmp.ne.s32.totalorder %s169, %s172
      %p181 = scmp.eq.s32.totalorder %s38, 1
      %p182 = por %p180, %p181
      %p183 = scmp.ne.s32.totalorder %s172, %s173
      %p184 = scmp.eq.s32.totalorder %s38, 0
      %p185 = por %p183, %p184
      %p186 = scmp.ne.s32.totalorder %s172, %s173
      %p187 = scmp.eq.s32.totalorder %s39, 1
      %p188 = por %p186, %p187
      %p190 = scmp.ne.s32.totalorder %s173, %s189
      %p191 = scmp.eq.s32.totalorder %s39, 0
      %p192 = por %p190, %p191
      %s193 = ssub.s32 %s33, %s40
      %p194 = scmp.eq.s32.totalorder %s193, 0
      %s196 = sadd.s32 %s195, 1
      %s197 = scalar_select %p194, %s195, %s196
      %p200 = pneg %p194
      %p201 = scmp.eq.s32.totalorder %s33, 1
      %p202 = por %p200, %p201
      %p203 = scmp.ne.s32.totalorder %s195, %s198
      %p204 = scmp.eq.s32.totalorder %s33, 0
      %p205 = por %p203, %p204
      %p206 = scmp.ne.s32.totalorder %s195, %s198
      %p207 = scmp.eq.s32.totalorder %s38, 1
      %p208 = por %p206, %p207
      %p209 = scmp.ne.s32.totalorder %s198, %s199
      %p210 = scmp.eq.s32.totalorder %s38, 0
      %p211 = por %p209, %p210
      %p212 = scmp.ne.s32.totalorder %s198, %s199
      %p213 = scmp.eq.s32.totalorder %s39, 1
      %p214 = por %p212, %p213
      %p216 = scmp.ne.s32.totalorder %s199, %s215
      %p217 = scmp.eq.s32.totalorder %s39, 0
      %p218 = por %p216, %p217
      %s219 = ssub.s32 %s33, %s40
      %p220 = scmp.eq.s32.totalorder %s219, 0
      %s222 = sadd.s32 %s221, 1
      %s223 = scalar_select %p220, %s221, %s222
      %p226 = pneg %p220
      %p227 = scmp.eq.s32.totalorder %s33, 1
      %p228 = por %p226, %p227
      %p229 = scmp.ne.s32.totalorder %s221, %s224
      %p230 = scmp.eq.s32.totalorder %s33, 0
      %p231 = por %p229, %p230
      %p232 = scmp.ne.s32.totalorder %s221, %s224
      %p233 = scmp.eq.s32.totalorder %s38, 1
      %p234 = por %p232, %p233
      %p235 = scmp.ne.s32.totalorder %s224, %s225
      %p236 = scmp.eq.s32.totalorder %s38, 0
      %p237 = por %p235, %p236
      %p238 = scmp.ne.s32.totalorder %s224, %s225
      %p239 = scmp.eq.s32.totalorder %s39, 1
      %p240 = por %p238, %p239
      %p242 = scmp.ne.s32.totalorder %s225, %s241
      %p243 = scmp.eq.s32.totalorder %s39, 0
      %p244 = por %p242, %p243
      %s245 = ssub.s32 %s33, %s40
      %p246 = scmp.eq.s32.totalorder %s245, 0
      %s248 = sadd.s32 %s247, 1
      %s249 = scalar_select %p246, %s247, %s248
      %p252 = pneg %p246
      %p253 = scmp.eq.s32.totalorder %s33, 1
      %p254 = por %p252, %p253
      %p255 = scmp.ne.s32.totalorder %s247, %s250
      %p256 = scmp.eq.s32.totalorder %s33, 0
      %p257 = por %p255, %p256
      %p258 = scmp.ne.s32.totalorder %s247, %s250
      %p259 = scmp.eq.s32.totalorder %s38, 1
      %p260 = por %p258, %p259
      %p261 = scmp.ne.s32.totalorder %s250, %s251
      %p262 = scmp.eq.s32.totalorder %s38, 0
      %p263 = por %p261, %p262
      %p264 = scmp.ne.s32.totalorder %s250, %s251
      %p265 = scmp.eq.s32.totalorder %s39, 1
      %p266 = por %p264, %p265
      %p268 = scmp.ne.s32.totalorder %s251, %s267
      %p269 = scmp.eq.s32.totalorder %s39, 0
      %p270 = por %p268, %p269
      %s271 = ssub.s32 %s33, %s40
      %p272 = scmp.eq.s32.totalorder %s271, 0
      %s274 = sadd.s32 %s273, 1
      %s275 = scalar_select %p272, %s273, %s274
      %p278 = pneg %p272
      %p279 = scmp.eq.s32.totalorder %s33, 1
      %p280 = por %p278, %p279
      %p281 = scmp.ne.s32.totalorder %s273, %s276
      %p282 = scmp.eq.s32.totalorder %s33, 0
      %p283 = por %p281, %p282
      %p284 = scmp.ne.s32.totalorder %s273, %s276
      %p285 = scmp.eq.s32.totalorder %s38, 1
      %p286 = por %p284, %p285
      %p287 = scmp.ne.s32.totalorder %s276, %s277
      %p288 = scmp.eq.s32.totalorder %s38, 0
      %p289 = por %p287, %p288
      %p290 = scmp.ne.s32.totalorder %s276, %s277
      %p291 = scmp.eq.s32.totalorder %s39, 1
      %p292 = por %p290, %p291
      %p294 = scmp.ne.s32.totalorder %s277, %s293
      %p295 = scmp.eq.s32.totalorder %s39, 0
      %p296 = por %p294, %p295
      %s297 = ssub.s32 %s33, %s40
      %p298 = scmp.eq.s32.totalorder %s297, 0
      %s300 = sadd.s32 %s299, 1
      %s301 = scalar_select %p298, %s299, %s300
      %p304 = pneg %p298
      %p305 = scmp.eq.s32.totalorder %s33, 1
      %p306 = por %p304, %p305
      %p307 = scmp.ne.s32.totalorder %s299, %s302
      %p308 = scmp.eq.s32.totalorder %s33, 0
      %p309 = por %p307, %p308
      %p310 = scmp.ne.s32.totalorder %s299, %s302
      %p311 = scmp.eq.s32.totalorder %s38, 1
      %p312 = por %p310, %p311
      %p313 = scmp.ne.s32.totalorder %s302, %s303
      %p314 = scmp.eq.s32.totalorder %s38, 0
      %p315 = por %p313, %p314
      %p316 = scmp.ne.s32.totalorder %s302, %s303
      %p317 = scmp.eq.s32.totalorder %s39, 1
      %p318 = por %p316, %p317
      %p320 = scmp.ne.s32.totalorder %s303, %s319
      %p321 = scmp.eq.s32.totalorder %s39, 0
      %p322 = por %p320, %p321
      %s323 = ssub.s32 %s33, %s40
      %p324 = scmp.eq.s32.totalorder %s323, 0
      %s326 = sadd.s32 %s325, 1
      %s327 = scalar_select %p324, %s325, %s326
      %p330 = pneg %p324
      %p331 = scmp.eq.s32.totalorder %s33, 1
      %p332 = por %p330, %p331
      %p333 = scmp.ne.s32.totalorder %s325, %s328
      %p334 = scmp.eq.s32.totalorder %s33, 0
      %p335 = por %p333, %p334
      %p336 = scmp.ne.s32.totalorder %s325, %s328
      %p337 = scmp.eq.s32.totalorder %s38, 1
      %p338 = por %p336, %p337
      %p339 = scmp.ne.s32.totalorder %s328, %s329
      %p340 = scmp.eq.s32.totalorder %s38, 0
      %p341 = por %p339, %p340
      %p342 = scmp.ne.s32.totalorder %s328, %s329
      %p343 = scmp.eq.s32.totalorder %s39, 1
      %p344 = por %p342, %p343
      %p346 = scmp.ne.s32.totalorder %s329, %s345
      %p347 = scmp.eq.s32.totalorder %s39, 0
      %p348 = por %p346, %p347
      %s349 = ssub.s32 %s33, %s40
      %p350 = scmp.eq.s32.totalorder %s349, 0
      %s352 = sadd.s32 %s351, 1
      %s353 = scalar_select %p350, %s351, %s352
      %p356 = pneg %p350
      %p357 = scmp.eq.s32.totalorder %s33, 1
      %p358 = por %p356, %p357
      %p359 = scmp.ne.s32.totalorder %s351, %s354
      %p360 = scmp.eq.s32.totalorder %s33, 0
      %p361 = por %p359, %p360
      %p362 = scmp.ne.s32.totalorder %s351, %s354
      %p363 = scmp.eq.s32.totalorder %s38, 1
      %p364 = por %p362, %p363
      %p365 = scmp.ne.s32.totalorder %s354, %s355
      %p366 = scmp.eq.s32.totalorder %s38, 0
      %p367 = por %p365, %p366
      %p368 = scmp.ne.s32.totalorder %s354, %s355
      %p369 = scmp.eq.s32.totalorder %s39, 1
      %p370 = por %p368, %p369
      %p372 = scmp.ne.s32.totalorder %s355, %s371
      %p373 = scmp.eq.s32.totalorder %s39, 0
      %p374 = por %p372, %p373
      %s375 = ssub.s32 %s33, %s40
      %p376 = scmp.eq.s32.totalorder %s375, 0
      %s378 = sadd.s32 %s377, 1
      %s379 = scalar_select %p376, %s377, %s378
      %p382 = pneg %p376
      %p383 = scmp.eq.s32.totalorder %s33, 1
      %p384 = por %p382, %p383
      %p385 = scmp.ne.s32.totalorder %s377, %s380
      %p386 = scmp.eq.s32.totalorder %s33, 0
      %p387 = por %p385, %p386
      %p388 = scmp.ne.s32.totalorder %s377, %s380
      %p389 = scmp.eq.s32.totalorder %s38, 1
      %p390 = por %p388, %p389
      %p391 = scmp.ne.s32.totalorder %s380, %s381
      %p392 = scmp.eq.s32.totalorder %s38, 0
      %p393 = por %p391, %p392
      %p394 = scmp.ne.s32.totalorder %s380, %s381
      %p395 = scmp.eq.s32.totalorder %s39, 1
      %p396 = por %p394, %p395
      %p398 = scmp.ne.s32.totalorder %s381, %s397
      %p399 = scmp.eq.s32.totalorder %s39, 0
      %p400 = por %p398, %p399
      %s401 = ssub.s32 %s33, %s40
      %p402 = scmp.eq.s32.totalorder %s401, 0
      %s404 = sadd.s32 %s403, 1
      %s405 = scalar_select %p402, %s403, %s404
      %p408 = pneg %p402
      %p409 = scmp.eq.s32.totalorder %s33, 1
      %p410 = por %p408, %p409
      %p411 = scmp.ne.s32.totalorder %s403, %s406
      %p412 = scmp.eq.s32.totalorder %s33, 0
      %p413 = por %p411, %p412
      %p414 = scmp.ne.s32.totalorder %s403, %s406
      %p415 = scmp.eq.s32.totalorder %s38, 1
      %p416 = por %p414, %p415
      %p417 = scmp.ne.s32.totalorder %s406, %s407
      %p418 = scmp.eq.s32.totalorder %s38, 0
      %p419 = por %p417, %p418
      %p420 = scmp.ne.s32.totalorder %s406, %s407
      %p421 = scmp.eq.s32.totalorder %s39, 1
      %p422 = por %p420, %p421
      %p424 = scmp.ne.s32.totalorder %s407, %s423
      %p425 = scmp.eq.s32.totalorder %s39, 0
      %p426 = por %p424, %p425
      %s427 = ssub.s32 %s33, %s40
      %p428 = scmp.eq.s32.totalorder %s427, 0
      %s430 = sadd.s32 %s429, 1
      %s431 = scalar_select %p428, %s429, %s430
      %p434 = pneg %p428
      %p435 = scmp.eq.s32.totalorder %s33, 1
      %p436 = por %p434, %p435
      %p437 = scmp.ne.s32.totalorder %s429, %s432
      %p438 = scmp.eq.s32.totalorder %s33, 0
      %p439 = por %p437, %p438
      %p440 = scmp.ne.s32.totalorder %s429, %s432
      %p441 = scmp.eq.s32.totalorder %s38, 1
      %p442 = por %p440, %p441
      %p443 = scmp.ne.s32.totalorder %s432, %s433
      %p444 = scmp.eq.s32.totalorder %s38, 0
      %p445 = por %p443, %p444
      %p446 = scmp.ne.s32.totalorder %s432, %s433
      %p447 = scmp.eq.s32.totalorder %s39, 1
      %p448 = por %p446, %p447
      %p450 = scmp.ne.s32.totalorder %s433, %s449
      %p451 = scmp.eq.s32.totalorder %s39, 0
      %p452 = por %p450, %p451
      %s453 = ssub.s32 %s33, %s40
      %p454 = scmp.eq.s32.totalorder %s453, 0
      %s456 = sadd.s32 %s455, 1
      %s457 = scalar_select %p454, %s455, %s456
      %p460 = pneg %p454
      %p461 = scmp.eq.s32.totalorder %s33, 1
      %p462 = por %p460, %p461
      %p463 = scmp.ne.s32.totalorder %s455, %s458
      %p464 = scmp.eq.s32.totalorder %s33, 0
      %p465 = por %p463, %p464
      %p466 = scmp.ne.s32.totalorder %s455, %s458
      %p467 = scmp.eq.s32.totalorder %s38, 1
      %p468 = por %p466, %p467
      %p469 = scmp.ne.s32.totalorder %s458, %s459
      %p470 = scmp.eq.s32.totalorder %s38, 0
      %p471 = por %p469, %p470
      %p472 = scmp.ne.s32.totalorder %s458, %s459
      %p473 = scmp.eq.s32.totalorder %s39, 1
      %p474 = por %p472, %p473
      %p476 = scmp.ne.s32.totalorder %s459, %s475
      %p477 = scmp.eq.s32.totalorder %s39, 0
      %p478 = por %p476, %p477
      %s480 = sadd.s32 %s479, 1
      %p483 = scmp.eq.s32.totalorder %s33, 1
      %p484 = scmp.ne.s32.totalorder %s479, %s481
      %p485 = scmp.eq.s32.totalorder %s33, 0
      %p486 = por %p484, %p485
      %p487 = scmp.ne.s32.totalorder %s479, %s481
      %p488 = scmp.eq.s32.totalorder %s38, 1
      %p489 = por %p487, %p488
      %p490 = scmp.ne.s32.totalorder %s481, %s482
      %p491 = scmp.eq.s32.totalorder %s38, 0
      %p492 = por %p490, %p491
      %p493 = scmp.ne.s32.totalorder %s481, %s482
      %p494 = scmp.eq.s32.totalorder %s39, 1
      %p495 = por %p493, %p494
      %p497 = scmp.ne.s32.totalorder %s482, %s496
      %p498 = scmp.eq.s32.totalorder %s39, 0
      %p499 = por %p497, %p498
      %p500 = scmp.le.s32.totalorder 1, %s33
      %p501 = scmp.lt.s32.totalorder %s33, 3
      %p502 = pnand %p500, %p501
      %p503 = pneg %p502
      // Predicated region
      $region9: #{tpu_custom_call.1} parent=5 // pred_check
        _
      $region10: #{tpu_custom_call.1} parent=5 // pred_check_branch
        %505 = sbr.rel (%p502) target = $region12
      $region11: #{tpu_custom_call.1} parent=5 // pred_region
        %s506 = ssub.s32 %s33, 1
        // Predicated region
        $region13: #{tpu_custom_call.1} parent=11 // pred_check
          %p507 = pneg %p54
        $region14: #{tpu_custom_call.1} parent=11 // pred_check_branch
          %509 = sbr.rel (%p507) target = $region16
        $region15: #{tpu_custom_call.1} parent=11 // pred_region
          _
        $region16: #{tpu_custom_call.1} parent=11 // pred_fallthru
          _
        // Predicated region
        $region17: #{tpu_custom_call.1} parent=11 // pred_check
          %p510 = pneg %p75
        $region18: #{tpu_custom_call.1} parent=11 // pred_check_branch
          %512 = sbr.rel (%p510) target = $region20
        $region19: #{tpu_custom_call.1} parent=11 // pred_region
          _
        $region20: #{tpu_custom_call.1} parent=11 // pred_fallthru
          _
        // Predicated region
        $region21: #{tpu_custom_call.1} parent=11 // pred_check
          %p513 = pneg %p96
        $region22: #{tpu_custom_call.1} parent=11 // pred_check_branch
          %515 = sbr.rel (%p513) target = $region24
        $region23: #{tpu_custom_call.1} parent=11 // pred_region
          %517 = vsyncadd [#allocation4], 0
          %s519 = sshll.u32 %s2, 4
          %s520 = int_to_ptr.hbm [resolvable:$true] %s519
          %s521 = sshll.u32 [#allocation3], 4
          %s522 = int_to_ptr.vmem [resolvable:$true] %s521
          %524 = dma.hbm_to_vmem [thread:$0]  %s520, 16, %s522, [#allocation4]
        $region24: #{tpu_custom_call.1} parent=11 // pred_fallthru
          _
        // Predicated region
        $region25: #{tpu_custom_call.1} parent=11 // pred_check
          %p525 = pneg %p117
        $region26: #{tpu_custom_call.1} parent=11 // pred_check_branch
          %527 = sbr.rel (%p525) target = $region28
        $region27: #{tpu_custom_call.1} parent=11 // pred_region
          %529 = vsyncadd [#allocation7], 0
          %s531 = sshll.u32 %s3, 4
          %s532 = int_to_ptr.hbm [resolvable:$true] %s531
          %s533 = sshll.u32 [#allocation6], 4
          %s534 = int_to_ptr.vmem [resolvable:$true] %s533
          %536 = dma.hbm_to_vmem [thread:$0]  %s532, 16, %s534, [#allocation7]
        $region28: #{tpu_custom_call.1} parent=11 // pred_fallthru
          _
        // Predicated region
        $region29: #{tpu_custom_call.1} parent=11 // pred_check
          %p537 = pneg %p138
        $region30: #{tpu_custom_call.1} parent=11 // pred_check_branch
          %539 = sbr.rel (%p537) target = $region32
        $region31: #{tpu_custom_call.1} parent=11 // pred_region
          %541 = vsyncadd [#allocation7], 0
          %s543 = sshll.u32 %s4, 4
          %s544 = int_to_ptr.hbm [resolvable:$true] %s543
          %s545 = sshll.u32 [#allocation8], 4
          %s546 = int_to_ptr.vmem [resolvable:$true] %s545
          %548 = dma.hbm_to_vmem [thread:$0]  %s544, 16, %s546, [#allocation7]
        $region32: #{tpu_custom_call.1} parent=11 // pred_fallthru
          _
        // Predicated region
        $region33: #{tpu_custom_call.1} parent=11 // pred_check
          %p549 = pneg %p159
        $region34: #{tpu_custom_call.1} parent=11 // pred_check_branch
          %551 = sbr.rel (%p549) target = $region36
        $region35: #{tpu_custom_call.1} parent=11 // pred_region
          _
        $region36: #{tpu_custom_call.1} parent=11 // pred_fallthru
          _
      $region12: #{tpu_custom_call.1} parent=5 // pred_fallthru
        _
      %p552 = scmp.lt.s32.totalorder %s33, 2
      // Predicated region
      $region37: #{tpu_custom_call.1} parent=5 // pred_check
        %p553 = pneg %p552
      $region38: #{tpu_custom_call.1} parent=5 // pred_check_branch
        %555 = sbr.rel (%p553) target = $region40
      $region39: #{tpu_custom_call.1} parent=5 // pred_region
        // Predicated region
        $region41: #{tpu_custom_call.1} parent=39 // pred_check
          %p556 = pneg %p179
        $region42: #{tpu_custom_call.1} parent=39 // pred_check_branch
          %558 = sbr.rel (%p556) target = $region44
        $region43: #{tpu_custom_call.1} parent=39 // pred_region
          %s559 = sand.u32 %s33, 1
          %s560 = scalar_lea.sflag [#allocation10], %s559
          %s561 = sand.u32 %s169, 1
          %s562 = smul.addr %s561, 16
          %s563 = scalar_lea.vmem [#allocation9], %s562
          %565 = vsyncadd %s560, 0
          %s566 = smul.addr %s33, 4
          %s567 = smul.addr %s566, 4
          %s568 = scalar_lea.hbm %s6, %s567
          %s569 = sshll.u32 %s568, 4
          %s570 = int_to_ptr.hbm [resolvable:$true] %s569
          %s571 = sshll.u32 %s563, 4
          %s572 = int_to_ptr.vmem [resolvable:$true] %s571
          %577 = dma.hbm_to_vmem [thread:$0]  %s570, 256, %s572, %s560, 64, 64, 4
        $region44: #{tpu_custom_call.1} parent=39 // pred_fallthru
          _
        // Predicated region
        $region45: #{tpu_custom_call.1} parent=39 // pred_check
          %p578 = pneg %p205
        $region46: #{tpu_custom_call.1} parent=39 // pred_check_branch
          %580 = sbr.rel (%p578) target = $region48
        $region47: #{tpu_custom_call.1} parent=39 // pred_region
          %p581 = scmp.lt.s32.totalorder %s33, 1
          %s582 = scalar_select %p581, %s33, 1
          %s583 = scalar_lea.vmem %s7, %s582
        $region48: #{tpu_custom_call.1} parent=39 // pred_fallthru
          _
        // Predicated region
        $region49: #{tpu_custom_call.1} parent=39 // pred_check
          %p584 = pneg %p231
        $region50: #{tpu_custom_call.1} parent=39 // pred_check_branch
          %586 = sbr.rel (%p584) target = $region52
        $region51: #{tpu_custom_call.1} parent=39 // pred_region
          %s587 = sand.u32 %s33, 1
          %s588 = scalar_lea.sflag [#allocation10], %s587
          %s589 = sand.u32 %s221, 1
          %s590 = smul.addr %s589, 16
          %s591 = scalar_lea.vmem [#allocation11], %s590
          %593 = vsyncadd %s588, 0
          %s594 = smul.addr %s33, 4
          %s595 = smul.addr %s594, 4
          %s596 = scalar_lea.hbm %s8, %s595
          %s597 = sshll.u32 %s596, 4
          %s598 = int_to_ptr.hbm [resolvable:$true] %s597
          %s599 = sshll.u32 %s591, 4
          %s600 = int_to_ptr.vmem [resolvable:$true] %s599
          %605 = dma.hbm_to_vmem [thread:$0]  %s598, 256, %s600, %s588, 64, 64, 4
        $region52: #{tpu_custom_call.1} parent=39 // pred_fallthru
          _
        // Predicated region
        $region53: #{tpu_custom_call.1} parent=39 // pred_check
          %p606 = pneg %p257
        $region54: #{tpu_custom_call.1} parent=39 // pred_check_branch
          %608 = sbr.rel (%p606) target = $region56
        $region55: #{tpu_custom_call.1} parent=39 // pred_region
          %p609 = scmp.lt.s32.totalorder %s33, 1
          %s610 = scalar_select %p609, %s33, 1
          %s611 = scalar_lea.vmem %s9, %s610
        $region56: #{tpu_custom_call.1} parent=39 // pred_fallthru
          _
        // Predicated region
        $region57: #{tpu_custom_call.1} parent=39 // pred_check
          %p612 = pneg %p283
        $region58: #{tpu_custom_call.1} parent=39 // pred_check_branch
          %614 = sbr.rel (%p612) target = $region60
        $region59: #{tpu_custom_call.1} parent=39 // pred_region
          %p615 = scmp.lt.s32.totalorder %s33, 1
          %s616 = scalar_select %p615, %s33, 1
          %s617 = scalar_lea.vmem %s10, %s616
        $region60: #{tpu_custom_call.1} parent=39 // pred_fallthru
          _
        // Predicated region
        $region61: #{tpu_custom_call.1} parent=39 // pred_check
          %p618 = pneg %p309
        $region62: #{tpu_custom_call.1} parent=39 // pred_check_branch
          %620 = sbr.rel (%p618) target = $region64
        $region63: #{tpu_custom_call.1} parent=39 // pred_region
          %p621 = scmp.lt.s32.totalorder %s33, 1
          %s622 = scalar_select %p621, %s33, 1
          %s623 = scalar_lea.vmem %s11, %s622
        $region64: #{tpu_custom_call.1} parent=39 // pred_fallthru
          _
        // Predicated region
        $region65: #{tpu_custom_call.1} parent=39 // pred_check
          %p624 = pneg %p335
        $region66: #{tpu_custom_call.1} parent=39 // pred_check_branch
          %626 = sbr.rel (%p624) target = $region68
        $region67: #{tpu_custom_call.1} parent=39 // pred_region
          %s627 = sand.u32 %s33, 1
          %s628 = scalar_lea.sflag [#allocation13], %s627
          %s629 = sand.u32 %s325, 1
          %s630 = smul.addr %s629, 16
          %s631 = scalar_lea.vmem [#allocation12], %s630
          %633 = vsyncadd %s628, 0
          %s634 = smul.addr %s33, 4
          %s635 = smul.addr %s634, 4
          %s636 = scalar_lea.hbm %s12, %s635
          %s637 = sshll.u32 %s636, 4
          %s638 = int_to_ptr.hbm [resolvable:$true] %s637
          %s639 = sshll.u32 %s631, 4
          %s640 = int_to_ptr.vmem [resolvable:$true] %s639
          %645 = dma.hbm_to_vmem [thread:$0]  %s638, 256, %s640, %s628, 64, 64, 4
        $region68: #{tpu_custom_call.1} parent=39 // pred_fallthru
          _
        // Predicated region
        $region69: #{tpu_custom_call.1} parent=39 // pred_check
          %p646 = pneg %p361
        $region70: #{tpu_custom_call.1} parent=39 // pred_check_branch
          %648 = sbr.rel (%p646) target = $region72
        $region71: #{tpu_custom_call.1} parent=39 // pred_region
          %p649 = scmp.lt.s32.totalorder %s33, 1
          %s650 = scalar_select %p649, %s33, 1
          %s651 = scalar_lea.vmem %s13, %s650
        $region72: #{tpu_custom_call.1} parent=39 // pred_fallthru
          _
        // Predicated region
        $region73: #{tpu_custom_call.1} parent=39 // pred_check
          %p652 = pneg %p387
        $region74: #{tpu_custom_call.1} parent=39 // pred_check_branch
          %654 = sbr.rel (%p652) target = $region76
        $region75: #{tpu_custom_call.1} parent=39 // pred_region
          %s655 = sand.u32 %s33, 1
          %s656 = scalar_lea.sflag [#allocation13], %s655
          %s657 = sand.u32 %s377, 1
          %s658 = smul.addr %s657, 16
          %s659 = scalar_lea.vmem [#allocation14], %s658
          %661 = vsyncadd %s656, 0
          %s662 = smul.addr %s33, 4
          %s663 = smul.addr %s662, 4
          %s664 = scalar_lea.hbm %s14, %s663
          %s665 = sshll.u32 %s664, 4
          %s666 = int_to_ptr.hbm [resolvable:$true] %s665
          %s667 = sshll.u32 %s659, 4
          %s668 = int_to_ptr.vmem [resolvable:$true] %s667
          %673 = dma.hbm_to_vmem [thread:$0]  %s666, 256, %s668, %s656, 64, 64, 4
        $region76: #{tpu_custom_call.1} parent=39 // pred_fallthru
          _
        // Predicated region
        $region77: #{tpu_custom_call.1} parent=39 // pred_check
          %p674 = pneg %p413
        $region78: #{tpu_custom_call.1} parent=39 // pred_check_branch
          %676 = sbr.rel (%p674) target = $region80
        $region79: #{tpu_custom_call.1} parent=39 // pred_region
          %p677 = scmp.lt.s32.totalorder %s33, 1
          %s678 = scalar_select %p677, %s33, 1
          %s679 = scalar_lea.vmem %s15, %s678
        $region80: #{tpu_custom_call.1} parent=39 // pred_fallthru
          _
        // Predicated region
        $region81: #{tpu_custom_call.1} parent=39 // pred_check
          %p680 = pneg %p439
        $region82: #{tpu_custom_call.1} parent=39 // pred_check_branch
          %682 = sbr.rel (%p680) target = $region84
        $region83: #{tpu_custom_call.1} parent=39 // pred_region
          %p683 = scmp.lt.s32.totalorder %s33, 1
          %s684 = scalar_select %p683, %s33, 1
          %s685 = scalar_lea.vmem %s16, %s684
        $region84: #{tpu_custom_call.1} parent=39 // pred_fallthru
          _
        // Predicated region
        $region85: #{tpu_custom_call.1} parent=39 // pred_check
          %p686 = pneg %p465
        $region86: #{tpu_custom_call.1} parent=39 // pred_check_branch
          %688 = sbr.rel (%p686) target = $region88
        $region87: #{tpu_custom_call.1} parent=39 // pred_region
          %p689 = scmp.lt.s32.totalorder %s33, 1
          %s690 = scalar_select %p689, %s33, 1
          %s691 = scalar_lea.vmem %s17, %s690
        $region88: #{tpu_custom_call.1} parent=39 // pred_fallthru
          _
      $region40: #{tpu_custom_call.1} parent=5 // pred_fallthru
        _
      %p692 = scmp.le.s32.totalorder 1, %s33
      %p693 = scmp.lt.s32.totalorder %s33, 3
      %p694 = pnand %p692, %p693
      %p695 = pneg %p694
      // Predicated region
      $region89: #{tpu_custom_call.1} parent=5 // pred_check
        _
      $region90: #{tpu_custom_call.1} parent=5 // pred_check_branch
        %697 = sbr.rel (%p694) target = $region92
      $region91: #{tpu_custom_call.1} parent=5 // pred_region
        %s698 = ssub.s32 %s33, 1
        // Predicated region
        $region93: #{tpu_custom_call.1} parent=91 // pred_check
          %p699 = pneg %p96
        $region94: #{tpu_custom_call.1} parent=91 // pred_check_branch
          %701 = sbr.rel (%p699) target = $region96
        $region95: #{tpu_custom_call.1} parent=91 // pred_region
          %703 = dma.done [#allocation4], 16
        $region96: #{tpu_custom_call.1} parent=91 // pred_fallthru
          _
        // Predicated region
        $region97: #{tpu_custom_call.1} parent=91 // pred_check
          %p704 = pneg %p117
        $region98: #{tpu_custom_call.1} parent=91 // pred_check_branch
          %706 = sbr.rel (%p704) target = $region100
        $region99: #{tpu_custom_call.1} parent=91 // pred_region
          %708 = dma.done [#allocation7], 16
        $region100: #{tpu_custom_call.1} parent=91 // pred_fallthru
          _
        // Predicated region
        $region101: #{tpu_custom_call.1} parent=91 // pred_check
          %p709 = pneg %p138
        $region102: #{tpu_custom_call.1} parent=91 // pred_check_branch
          %711 = sbr.rel (%p709) target = $region104
        $region103: #{tpu_custom_call.1} parent=91 // pred_region
          %713 = dma.done [#allocation7], 16
        $region104: #{tpu_custom_call.1} parent=91 // pred_fallthru
          _
        %s714 = sand.u32 %s38, 1
        %s715 = scalar_lea.sflag [#allocation10], %s714
        %s716 = sand.u32 %s172, 1
        %s717 = smul.addr %s716, 16
        %s718 = scalar_lea.vmem [#allocation9], %s717
        // Predicated region
        $region105: #{tpu_custom_call.1} parent=91 // pred_check
          %p719 = pneg %p185
        $region106: #{tpu_custom_call.1} parent=91 // pred_check_branch
          %721 = sbr.rel (%p719) target = $region108
        $region107: #{tpu_custom_call.1} parent=91 // pred_region
          %723 = dma.done %s715, 256
        $region108: #{tpu_custom_call.1} parent=91 // pred_fallthru
          _
        %s724 = sand.u32 %s38, 1
        %s725 = scalar_lea.sflag [#allocation10], %s724
        %s726 = sand.u32 %s224, 1
        %s727 = smul.addr %s726, 16
        %s728 = scalar_lea.vmem [#allocation11], %s727
        // Predicated region
        $region109: #{tpu_custom_call.1} parent=91 // pred_check
          %p729 = pneg %p237
        $region110: #{tpu_custom_call.1} parent=91 // pred_check_branch
          %731 = sbr.rel (%p729) target = $region112
        $region111: #{tpu_custom_call.1} parent=91 // pred_region
          %733 = dma.done %s725, 256
        $region112: #{tpu_custom_call.1} parent=91 // pred_fallthru
          _
        %s734 = sand.u32 %s38, 1
        %s735 = scalar_lea.sflag [#allocation13], %s734
        %s736 = sand.u32 %s328, 1
        %s737 = smul.addr %s736, 16
        %s738 = scalar_lea.vmem [#allocation12], %s737
        // Predicated region
        $region113: #{tpu_custom_call.1} parent=91 // pred_check
          %p739 = pneg %p341
        $region114: #{tpu_custom_call.1} parent=91 // pred_check_branch
          %741 = sbr.rel (%p739) target = $region116
        $region115: #{tpu_custom_call.1} parent=91 // pred_region
          %743 = dma.done %s735, 256
        $region116: #{tpu_custom_call.1} parent=91 // pred_fallthru
          _
        %s744 = sand.u32 %s38, 1
        %s745 = scalar_lea.sflag [#allocation13], %s744
        %s746 = sand.u32 %s380, 1
        %s747 = smul.addr %s746, 16
        %s748 = scalar_lea.vmem [#allocation14], %s747
        // Predicated region
        $region117: #{tpu_custom_call.1} parent=91 // pred_check
          %p749 = pneg %p393
        $region118: #{tpu_custom_call.1} parent=91 // pred_check_branch
          %751 = sbr.rel (%p749) target = $region120
        $region119: #{tpu_custom_call.1} parent=91 // pred_region
          %753 = dma.done %s745, 256
        $region120: #{tpu_custom_call.1} parent=91 // pred_fallthru
          _
        %p754 = pneg %p54
        %p755 = pneg %p51
        %p756 = pneg %p75
        %p757 = pneg %p72
        %p758 = pneg %p96
        %p759 = pneg %p93
        %p760 = pneg %p117
        %p761 = pneg %p114
        %p762 = pneg %p138
        %p763 = pneg %p135
        %p764 = pneg %p159
        %p765 = pneg %p156
        %s766 = sand.u32 %s38, 1
        %s767 = scalar_lea.sflag [#allocation10], %s766
        %s768 = sand.u32 %s172, 1
        %s769 = smul.addr %s768, 16
        %s770 = scalar_lea.vmem [#allocation9], %s769
        %p771 = pneg %p185
        %p772 = pneg %p182
        %p773 = scmp.lt.s32.totalorder %s38, 1
        %s774 = scalar_select %p773, %s38, 1
        %s775 = scalar_lea.vmem %s7, %s774
        %p776 = pneg %p211
        %p777 = pneg %p208
        %s778 = sand.u32 %s38, 1
        %s779 = scalar_lea.sflag [#allocation10], %s778
        %s780 = sand.u32 %s224, 1
        %s781 = smul.addr %s780, 16
        %s782 = scalar_lea.vmem [#allocation11], %s781
        %p783 = pneg %p237
        %p784 = pneg %p234
        %p785 = scmp.lt.s32.totalorder %s38, 1
        %s786 = scalar_select %p785, %s38, 1
        %s787 = scalar_lea.vmem %s9, %s786
        %p788 = pneg %p263
        %p789 = pneg %p260
        %p790 = scmp.lt.s32.totalorder %s38, 1
        %s791 = scalar_select %p790, %s38, 1
        %s792 = scalar_lea.vmem %s10, %s791
        %p793 = pneg %p289
        %p794 = pneg %p286
        %p795 = scmp.lt.s32.totalorder %s38, 1
        %s796 = scalar_select %p795, %s38, 1
        %s797 = scalar_lea.vmem %s11, %s796
        %p798 = pneg %p315
        %p799 = pneg %p312
        %s800 = sand.u32 %s38, 1
        %s801 = scalar_lea.sflag [#allocation13], %s800
        %s802 = sand.u32 %s328, 1
        %s803 = smul.addr %s802, 16
        %s804 = scalar_lea.vmem [#allocation12], %s803
        %p805 = pneg %p341
        %p806 = pneg %p338
        %p807 = scmp.lt.s32.totalorder %s38, 1
        %s808 = scalar_select %p807, %s38, 1
        %s809 = scalar_lea.vmem %s13, %s808
        %p810 = pneg %p367
        %p811 = pneg %p364
        %s812 = sand.u32 %s38, 1
        %s813 = scalar_lea.sflag [#allocation13], %s812
        %s814 = sand.u32 %s380, 1
        %s815 = smul.addr %s814, 16
        %s816 = scalar_lea.vmem [#allocation14], %s815
        %p817 = pneg %p393
        %p818 = pneg %p390
        %p819 = scmp.lt.s32.totalorder %s38, 1
        %s820 = scalar_select %p819, %s38, 1
        %s821 = scalar_lea.vmem %s15, %s820
        %p822 = pneg %p419
        %p823 = pneg %p416
        %p824 = scmp.lt.s32.totalorder %s38, 1
        %s825 = scalar_select %p824, %s38, 1
        %s826 = scalar_lea.vmem %s16, %s825
        %p827 = pneg %p445
        %p828 = pneg %p442
        %p829 = scmp.lt.s32.totalorder %s38, 1
        %s830 = scalar_select %p829, %s38, 1
        %s831 = scalar_lea.vmem %s17, %s830
        %p832 = pneg %p471
        %p833 = pneg %p468
        %p834 = pneg %p492
        %p835 = pneg %p489
        %p836 = scmp.lt.s32.totalorder %s38, 1
        %s837 = scalar_select %p836, %s38, 1
        %s838 = scalar_lea.vmem %s7, %s837
        %p839 = scmp.lt.s32.totalorder %s38, 1
        %s840 = scalar_select %p839, %s38, 1
        %s841 = scalar_lea.vmem %s9, %s840
        %p842 = scmp.lt.s32.totalorder %s38, 1
        %s843 = scalar_select %p842, %s38, 1
        %s844 = scalar_lea.vmem %s10, %s843
        %p845 = scmp.lt.s32.totalorder %s38, 1
        %s846 = scalar_select %p845, %s38, 1
        %s847 = scalar_lea.vmem %s11, %s846
        %p848 = scmp.lt.s32.totalorder %s38, 1
        %s849 = scalar_select %p848, %s38, 1
        %s850 = scalar_lea.vmem %s13, %s849
        %p851 = scmp.lt.s32.totalorder %s38, 1
        %s852 = scalar_select %p851, %s38, 1
        %s853 = scalar_lea.vmem %s15, %s852
        %p854 = scmp.lt.s32.totalorder %s38, 1
        %s855 = scalar_select %p854, %s38, 1
        %s856 = scalar_lea.vmem %s16, %s855
        %p857 = scmp.lt.s32.totalorder %s38, 1
        %s858 = scalar_select %p857, %s38, 1
        %s859 = scalar_lea.vmem %s17, %s858
        %p861 = scmp.eq.s32.totalorder %s38, 0
        // Predicated region
        $region121: #{tpu_custom_call.1} parent=91 // pred_check
          %p862 = pneg %p861
        $region122: #{tpu_custom_call.1} parent=91 // pred_check_branch
          %864 = sbr.rel (%p862) target = $region124
        $region123: #{tpu_custom_call.1} parent=91 // pred_region
          %v865 = vld [vmem:[%s0] sm:$0xff]
          %v866 = vld [vmem:[%s0 + $0x8] sm:$0xff]
          %v867 = vld [vmem:[%s0 + $0x10] sm:$0xff]
          %v868 = vld [vmem:[%s0 + $0x18] sm:$0xff]
          %v869 = vpack.c.bf16 %v866, %v865
          %v870 = vpack.c.bf16 %v868, %v867
          %v871 = vld [vmem:[%s1] sm:$0xf]
          %v872 = vld [vmem:[%s1 + $0x4] sm:$0x3]
          %v873 = vld [vmem:[#allocation3] sm:$0x1]
          %v875 = vperm.slane %v873, 0
          %v879 = vunpack.c.l.b16 %v871
          %v880 = vunpack.c.l.b16 %v872
          %v881 = vpack.c.b16 %v880, %v879
          %vm882 = vcmask 97280
          %v884 = vsel %vm882, %v869, 0
          %v887 = vsel %vm882, %v870, 0
          %vm889 = vcmask 1045504
          %v891 = vsel %vm889, %v881, 0
          %893 = vmatpush.bf16.msra.mxu0 0
          %894 = vmatpush.bf16.msra.mxu0 0
          %895 = vmatpush.bf16.msra.mxu0 0
          %896 = vmatpush.bf16.msra.mxu0 0
          %897 = vmatpush.bf16.msra.mxu0 0
          %898 = vmatpush.bf16.msra.mxu0 0
          %899 = vmatpush.bf16.msra.mxu0 0
          %900 = vmatpush.bf16.msra.mxu0 %v891
          %901 = vmatmul.bf16.gmra.mxu0 %v884
          %v902 = vpop.f32.mrf.mxu0
          %v903 = vadd.f32 %v875, %v902
          %v904 = vpop.f32.mrf.mxu0
          %v905 = vadd.f32 %v875, %v904
          %906 = vmatmul.bf16.gmra.mxu0 %v887
          %v907 = vpop.f32.mrf.mxu0
          %v908 = vadd.f32 %v875, %v907
          %v909 = vpop.f32.mrf.mxu0
          %v910 = vadd.f32 %v875, %v909
          %911 = vdwg.mxu0
          %vm912 = vcmask 261120
          %v913 = vsel %vm912, %v903, 0.0
          %v914 = vsel %vm912, %v905, 0.0
          %v915 = vadd.f32 %v913, %v914
          %v916 = vsel %vm912, %v908, 0.0
          %v917 = vadd.f32 %v915, %v916
          %v918 = vsel %vm912, %v910, 0.0
          %v919 = vadd.f32 %v917, %v918
          %v920 = vrot.slane %v919, 4
          %v921 = vadd.f32 %v919, %v920
          %v922 = vrot.slane %v921, 2
          %v923 = vadd.f32 %v921, %v922
          %v924 = vrot.slane %v923, 1
          %v925 = vadd.f32 %v923, %v924
          %v926 = vrcp.pop 32.0
          %v927 = vmul.f32 32.0, %v926
          %v928 = vsub.f32 1.0, %v927
          %v929 = vmul.f32 %v926, %v928
          %v930 = vadd.f32 %v926, %v929
          %vm931 = vweird.f32 %v926
          %v932 = vsel %vm931, %v926, %v930
          %v933 = vmul.f32 %v925, %v932
          %v934 = vsub.f32 %v903, %v933
          %v935 = vsub.f32 %v905, %v933
          %v936 = vsub.f32 %v908, %v933
          %v937 = vsub.f32 %v910, %v933
          %v938 = vmul.f32 %v934, %v934
          %v939 = vmul.f32 %v935, %v935
          %v940 = vmul.f32 %v936, %v936
          %v941 = vmul.f32 %v937, %v937
          %v942 = vsel %vm912, %v938, 0.0
          %v943 = vsel %vm912, %v939, 0.0
          %v944 = vadd.f32 %v942, %v943
          %v945 = vsel %vm912, %v940, 0.0
          %v946 = vadd.f32 %v944, %v945
          %v947 = vsel %vm912, %v941, 0.0
          %v948 = vadd.f32 %v946, %v947
          %v949 = vrot.slane %v948, 4
          %v950 = vadd.f32 %v948, %v949
          %v951 = vrot.slane %v950, 2
          %v952 = vadd.f32 %v950, %v951
          %v953 = vrot.slane %v952, 1
          %v954 = vadd.f32 %v952, %v953
          %v955 = vmul.f32 %v954, %v932
          %v956 = vadd.f32 %v955, 1e-05
          %v957 = vrsqrt.pop %v956
          %v958 = vmul.f32 %v957, %v956
          %v959 = vmul.f32 %v958, %v957
          %v960 = vmul.f32 0.5, %v959
          %v961 = vsub.f32 1.5, %v960
          %v962 = vmul.f32 %v957, %v961
          %vm963 = vweird.f32 %v956
          %vm964 = vweird.f32 %v957
          %vm965 = vmor %vm963, %vm964
          %v966 = vsel %vm965, %v957, %v962
          %v967 = vmul.f32 %v934, %v966
          %v968 = vmul.f32 %v935, %v966
          %v969 = vmul.f32 %v936, %v966
          %v970 = vmul.f32 %v937, %v966
          %v971 = vld [vmem:[#allocation6] sm:$0x1]
          %v973 = vperm.slane %v971, 0
          %v975 = vmul.f32 %v967, %v973
          %v976 = vmul.f32 %v968, %v973
          %v977 = vmul.f32 %v969, %v973
          %v978 = vmul.f32 %v970, %v973
          %v979 = vld [vmem:[#allocation8] sm:$0x1]
          %v981 = vperm.slane %v979, 0
          %v983 = vadd.f32 %v975, %v981
          %v984 = vadd.f32 %v976, %v981
          %v985 = vadd.f32 %v977, %v981
          %v986 = vadd.f32 %v978, %v981
          %v987 = vmax.f32 %v983, 0.0
          %v988 = vmax.f32 %v984, 0.0
          %v989 = vmax.f32 %v985, 0.0
          %v990 = vmax.f32 %v986, 0.0
          %v991 = vld [vmem:[%s5] sm:$0xff]
          %v992 = vld [vmem:[%s5 + $0x8] sm:$0xff]
          %v993 = vld [vmem:[%s5 + $0x10] sm:$0xff]
          %v994 = vld [vmem:[%s5 + $0x18] sm:$0xff]
          %v995 = vadd.f32 %v987, %v991
          %v996 = vadd.f32 %v988, %v992
          %v997 = vadd.f32 %v989, %v993
          %v998 = vadd.f32 %v990, %v994
          %999 = vst.msk [vmem:[#allocation2] sm:$0xff] %vm912, %v995
          %1000 = vst.msk [vmem:[#allocation2 + $0x8] sm:$0xff] %vm912, %v996
          %1001 = vst.msk [vmem:[#allocation2 + $0x10] sm:$0xff] %vm912, %v997
          %1002 = vst.msk [vmem:[#allocation2 + $0x18] sm:$0xff] %vm912, %v998
        $region124: #{tpu_custom_call.1} parent=91 // pred_fallthru
          _
        %v1003 = vld [vmem:[#allocation2] sm:$0xff]
        %v1004 = vld [vmem:[#allocation2 + $0x8] sm:$0xff]
        %v1005 = vld [vmem:[#allocation2 + $0x10] sm:$0xff]
        %v1006 = vld [vmem:[#allocation2 + $0x18] sm:$0xff]
        %v1007 = vpack.c.bf16 %v1004, %v1003
        %v1008 = vpack.c.bf16 %v1006, %v1005
        %v1009 = vld [vmem:[%s718] sm:$0xf]
        %v1010 = vld [vmem:[%s718 + $0x4] sm:$0xf]
        %v1011 = vld [vmem:[%s718 + $0x8] sm:$0xf]
        %v1012 = vld [vmem:[%s718 + $0xc] sm:$0xf]
        %v1013 = vld [vmem:[%s838] sm:$0x1]
        %v1015 = vperm.slane %v1013, 0
        %v1021 = vunpack.c.l.b16 %v1009
        %v1022 = vunpack.c.l.b16 %v1010
        %v1023 = vunpack.c.l.b16 %v1011
        %v1024 = vunpack.c.l.b16 %v1012
        %v1025 = vpack.c.b16 %v1022, %v1021
        %v1026 = vpack.c.b16 %v1024, %v1023
        %vm1029 = vcmask 261120
        %v1031 = vsel %vm1029, %v1007, 0
        %v1034 = vsel %vm1029, %v1008, 0
        %1036 = vmatpush.bf16.msra.mxu0 0
        %1037 = vmatpush.bf16.msra.mxu0 0
        %1038 = vmatpush.bf16.msra.mxu0 0
        %1039 = vmatpush.bf16.msra.mxu0 0
        %1040 = vmatpush.bf16.msra.mxu0 0
        %1041 = vmatpush.bf16.msra.mxu0 0
        %1042 = vmatpush.bf16.msra.mxu0 %v1026
        %1043 = vmatpush.bf16.msra.mxu0 %v1025
        %1044 = vmatmul.bf16.gmra.mxu0 %v1031
        %v1045 = vpop.f32.mrf.mxu0
        %v1046 = vadd.f32 %v1015, %v1045
        %v1047 = vpop.f32.mrf.mxu0
        %v1048 = vadd.f32 %v1015, %v1047
        %1049 = vmatmul.bf16.gmra.mxu0 %v1034
        %v1050 = vpop.f32.mrf.mxu0
        %v1051 = vadd.f32 %v1015, %v1050
        %v1052 = vpop.f32.mrf.mxu0
        %v1053 = vadd.f32 %v1015, %v1052
        %1054 = vdwg.mxu0
        %v1055 = vpack.c.bf16 %v1046, %v1046
        %v1056 = vpack.c.bf16 %v1048, %v1048
        %v1057 = vpack.c.bf16 %v1051, %v1051
        %v1058 = vpack.c.bf16 %v1053, %v1053
        %v1059 = vld [vmem:[%s728] sm:$0xf]
        %v1060 = vld [vmem:[%s728 + $0x4] sm:$0xf]
        %v1061 = vld [vmem:[%s728 + $0x8] sm:$0xf]
        %v1062 = vld [vmem:[%s728 + $0xc] sm:$0xf]
        %v1065 = vunpack.c.l.b16 %v1055
        %v1066 = vunpack.c.l.b16 %v1056
        %v1067 = vpack.c.b16 %v1066, %v1065
        %1068 = vrot.lane.b32.xlu0 %v1067, 96
        %v1069 = vpop.permute.xlu0 %1068
        %vm1070 = vcmask 64512
        %v1072 = vsel %vm1070, %v1067, 0
        %v1075 = vsel %vm1070, %v1069, 0
        %1077 = vmatpush.bf16.xpose.msra.mxu0 0
        %1078 = vmatpush.bf16.xpose.msra.mxu0 0
        %1079 = vmatpush.bf16.xpose.msra.mxu0 0
        %1080 = vmatpush.bf16.xpose.msra.mxu0 0
        %1081 = vmatpush.bf16.xpose.msra.mxu0 0
        %1082 = vmatpush.bf16.xpose.msra.mxu0 0
        %1083 = vmatpush.bf16.xpose.msra.mxu0 0
        %1084 = vmatpush.bf16.xpose.msra.mxu0 %v1075
        %1085 = vmatmul.bf16.gmra.mxu0 %v1072
        %v1086 = vpop.f32.mrf.mxu0
        %v1087 = vadd.f32 0.0, %v1086
        %v1088 = vpop.f32.mrf.mxu0
        %v1089 = vadd.f32 0.0, %v1088
        %1090 = vdwg.mxu0
        %v1093 = vunpack.c.l.b16 %v1057
        %v1094 = vunpack.c.l.b16 %v1058
        %v1095 = vpack.c.b16 %v1094, %v1093
        %1096 = vrot.lane.b32.xlu0 %v1095, 96
        %v1097 = vpop.permute.xlu0 %1096
        %v1099 = vsel %vm1070, %v1095, 0
        %v1102 = vsel %vm1070, %v1097, 0
        %1104 = vmatpush.bf16.xpose.msra.mxu0 0
        %1105 = vmatpush.bf16.xpose.msra.mxu0 0
        %1106 = vmatpush.bf16.xpose.msra.mxu0 0
        %1107 = vmatpush.bf16.xpose.msra.mxu0 0
        %1108 = vmatpush.bf16.xpose.msra.mxu0 0
        %1109 = vmatpush.bf16.xpose.msra.mxu0 0
        %1110 = vmatpush.bf16.xpose.msra.mxu0 0
        %1111 = vmatpush.bf16.xpose.msra.mxu0 %v1102
        %1112 = vmatmul.bf16.gmra.mxu0 %v1099
        %v1113 = vpop.f32.mrf.mxu0
        %v1114 = vadd.f32 0.0, %v1113
        %v1115 = vpop.f32.mrf.mxu0
        %v1116 = vadd.f32 0.0, %v1115
        %1117 = vdwg.mxu0
        %vm1118 = vcmask 130048
        %v1119 = vsel %vm1118, %v1087, -inf
        %1120 = vmax.xlane.f32.xlu0 %v1119
        %v1121 = vpop.xlane.xlu0 %1120
        %v1122 = vsel %vm1118, %v1089, -inf
        %1123 = vmax.xlane.f32.xlu0 %v1122
        %v1124 = vpop.xlane.xlu0 %1123
        %v1125 = vsel %vm1118, %v1114, -inf
        %1126 = vmax.xlane.f32.xlu0 %v1125
        %v1127 = vpop.xlane.xlu0 %1126
        %v1128 = vsel %vm1118, %v1116, -inf
        %1129 = vmax.xlane.f32.xlu0 %v1128
        %v1130 = vpop.xlane.xlu0 %1129
        %v1131 = vsub.f32 %v1087, %v1121
        %v1132 = vsub.f32 %v1089, %v1124
        %v1133 = vsub.f32 %v1114, %v1127
        %v1134 = vsub.f32 %v1116, %v1130
        %v1135 = vmul.f32 %v1131, 1.442695
        %v1136 = vpow.pop %v1135
        %v1137 = vmul.f32 %v1132, 1.442695
        %v1138 = vpow.pop %v1137
        %v1139 = vmul.f32 %v1133, 1.442695
        %v1140 = vpow.pop %v1139
        %v1141 = vmul.f32 %v1134, 1.442695
        %v1142 = vpow.pop %v1141
        %v1143 = vsel %vm1118, %v1136, 0.0
        %1144 = vadd.xlane.f32.xlu0 %v1143
        %v1145 = vpop.xlane.xlu0 %1144
        %v1146 = vsel %vm1118, %v1138, 0.0
        %1147 = vadd.xlane.f32.xlu0 %v1146
        %v1148 = vpop.xlane.xlu0 %1147
        %v1149 = vsel %vm1118, %v1140, 0.0
        %1150 = vadd.xlane.f32.xlu0 %v1149
        %v1151 = vpop.xlane.xlu0 %1150
        %v1152 = vsel %vm1118, %v1142, 0.0
        %1153 = vadd.xlane.f32.xlu0 %v1152
        %v1154 = vpop.xlane.xlu0 %1153
        %v1155 = vrcp.pop %v1145
        %v1156 = vrcp.pop %v1148
        %v1157 = vrcp.pop %v1151
        %v1158 = vrcp.pop %v1154
        %v1159 = vmul.f32 %v1136, %v1155
        %v1160 = vmul.f32 %v1138, %v1156
        %v1161 = vmul.f32 %v1140, %v1157
        %v1162 = vmul.f32 %v1142, %v1158
        %v1163 = vpack.c.bf16 %v1159, %v1159
        %v1164 = vpack.c.bf16 %v1160, %v1160
        %v1165 = vpack.c.bf16 %v1161, %v1161
        %v1166 = vpack.c.bf16 %v1162, %v1162
        %v1169 = vunpack.c.l.b16 %v1163
        %v1170 = vunpack.c.l.b16 %v1164
        %v1171 = vpack.c.b16 %v1170, %v1169
        %1172 = vrot.lane.b32.xlu0 %v1067, 64
        %v1173 = vpop.permute.xlu0 %1172
        %v1176 = vsel %vm1118, %v1171, 0
        %1178 = vmatpush.bf16.msra.mxu0 0
        %1179 = vmatpush.bf16.msra.mxu0 0
        %1180 = vmatpush.bf16.msra.mxu0 0
        %1181 = vmatpush.bf16.msra.mxu0 0
        %1182 = vmatpush.bf16.msra.mxu0 0
        %1183 = vmatpush.bf16.msra.mxu0 0
        %1184 = vmatpush.bf16.msra.mxu0 0
        %1185 = vmatpush.bf16.msra.mxu0 %v1173
        %1186 = vmatmul.bf16.gmra.mxu0 %v1176
        %v1187 = vpop.f32.mrf.mxu0
        %v1188 = vadd.f32 0.0, %v1187
        %v1189 = vpop.f32.mrf.mxu0
        %v1190 = vadd.f32 0.0, %v1189
        %1191 = vdwg.mxu0
        %v1194 = vunpack.c.l.b16 %v1165
        %v1195 = vunpack.c.l.b16 %v1166
        %v1196 = vpack.c.b16 %v1195, %v1194
        %1197 = vrot.lane.b32.xlu0 %v1095, 64
        %v1198 = vpop.permute.xlu0 %1197
        %v1201 = vsel %vm1118, %v1196, 0
        %1203 = vmatpush.bf16.msra.mxu0 0
        %1204 = vmatpush.bf16.msra.mxu0 0
        %1205 = vmatpush.bf16.msra.mxu0 0
        %1206 = vmatpush.bf16.msra.mxu0 0
        %1207 = vmatpush.bf16.msra.mxu0 0
        %1208 = vmatpush.bf16.msra.mxu0 0
        %1209 = vmatpush.bf16.msra.mxu0 0
        %1210 = vmatpush.bf16.msra.mxu0 %v1198
        %1211 = vmatmul.bf16.gmra.mxu0 %v1201
        %v1212 = vpop.f32.mrf.mxu0
        %v1213 = vadd.f32 0.0, %v1212
        %v1214 = vpop.f32.mrf.mxu0
        %v1215 = vadd.f32 0.0, %v1214
        %1216 = vdwg.mxu0
        %v1217 = vpack.c.bf16 %v1190, %v1188
        %v1218 = vpack.c.bf16 %v1215, %v1213
        %1219 = vrot.lane.b32.xlu0 %v1067, 120
        %v1220 = vpop.permute.xlu0 %1219
        %1221 = vrot.lane.b32.xlu0 %v1067, 88
        %v1222 = vpop.permute.xlu0 %1221
        %v1224 = vsel %vm1070, %v1220, 0
        %v1227 = vsel %vm1070, %v1222, 0
        %1229 = vmatpush.bf16.xpose.msra.mxu0 0
        %1230 = vmatpush.bf16.xpose.msra.mxu0 0
        %1231 = vmatpush.bf16.xpose.msra.mxu0 0
        %1232 = vmatpush.bf16.xpose.msra.mxu0 0
        %1233 = vmatpush.bf16.xpose.msra.mxu0 0
        %1234 = vmatpush.bf16.xpose.msra.mxu0 0
        %1235 = vmatpush.bf16.xpose.msra.mxu0 0
        %1236 = vmatpush.bf16.xpose.msra.mxu0 %v1227
        %1237 = vmatmul.bf16.gmra.mxu0 %v1224
        %v1238 = vpop.f32.mrf.mxu0
        %v1239 = vadd.f32 0.0, %v1238
        %v1240 = vpop.f32.mrf.mxu0
        %v1241 = vadd.f32 0.0, %v1240
        %1242 = vdwg.mxu0
        %1243 = vrot.lane.b32.xlu0 %v1095, 120
        %v1244 = vpop.permute.xlu0 %1243
        %1245 = vrot.lane.b32.xlu0 %v1095, 88
        %v1246 = vpop.permute.xlu0 %1245
        %v1248 = vsel %vm1070, %v1244, 0
        %v1251 = vsel %vm1070, %v1246, 0
        %1253 = vmatpush.bf16.xpose.msra.mxu0 0
        %1254 = vmatpush.bf16.xpose.msra.mxu0 0
        %1255 = vmatpush.bf16.xpose.msra.mxu0 0
        %1256 = vmatpush.bf16.xpose.msra.mxu0 0
        %1257 = vmatpush.bf16.xpose.msra.mxu0 0
        %1258 = vmatpush.bf16.xpose.msra.mxu0 0
        %1259 = vmatpush.bf16.xpose.msra.mxu0 0
        %1260 = vmatpush.bf16.xpose.msra.mxu0 %v1251
        %1261 = vmatmul.bf16.gmra.mxu0 %v1248
        %v1262 = vpop.f32.mrf.mxu0
        %v1263 = vadd.f32 0.0, %v1262
        %v1264 = vpop.f32.mrf.mxu0
        %v1265 = vadd.f32 0.0, %v1264
        %1266 = vdwg.mxu0
        %v1267 = vsel %vm1118, %v1239, -inf
        %1268 = vmax.xlane.f32.xlu0 %v1267
        %v1269 = vpop.xlane.xlu0 %1268
        %v1270 = vsel %vm1118, %v1241, -inf
        %1271 = vmax.xlane.f32.xlu0 %v1270
        %v1272 = vpop.xlane.xlu0 %1271
        %v1273 = vsel %vm1118, %v1263, -inf
        %1274 = vmax.xlane.f32.xlu0 %v1273
        %v1275 = vpop.xlane.xlu0 %1274
        %v1276 = vsel %vm1118, %v1265, -inf
        %1277 = vmax.xlane.f32.xlu0 %v1276
        %v1278 = vpop.xlane.xlu0 %1277
        %v1279 = vsub.f32 %v1239, %v1269
        %v1280 = vsub.f32 %v1241, %v1272
        %v1281 = vsub.f32 %v1263, %v1275
        %v1282 = vsub.f32 %v1265, %v1278
        %v1283 = vmul.f32 %v1279, 1.442695
        %v1284 = vpow.pop %v1283
        %v1285 = vmul.f32 %v1280, 1.442695
        %v1286 = vpow.pop %v1285
        %v1287 = vmul.f32 %v1281, 1.442695
        %v1288 = vpow.pop %v1287
        %v1289 = vmul.f32 %v1282, 1.442695
        %v1290 = vpow.pop %v1289
        %v1291 = vsel %vm1118, %v1284, 0.0
        %1292 = vadd.xlane.f32.xlu0 %v1291
        %v1293 = vpop.xlane.xlu0 %1292
        %v1294 = vsel %vm1118, %v1286, 0.0
        %1295 = vadd.xlane.f32.xlu0 %v1294
        %v1296 = vpop.xlane.xlu0 %1295
        %v1297 = vsel %vm1118, %v1288, 0.0
        %1298 = vadd.xlane.f32.xlu0 %v1297
        %v1299 = vpop.xlane.xlu0 %1298
        %v1300 = vsel %vm1118, %v1290, 0.0
        %1301 = vadd.xlane.f32.xlu0 %v1300
        %v1302 = vpop.xlane.xlu0 %1301
        %v1303 = vrcp.pop %v1293
        %v1304 = vrcp.pop %v1296
        %v1305 = vrcp.pop %v1299
        %v1306 = vrcp.pop %v1302
        %v1307 = vmul.f32 %v1284, %v1303
        %v1308 = vmul.f32 %v1286, %v1304
        %v1309 = vmul.f32 %v1288, %v1305
        %v1310 = vmul.f32 %v1290, %v1306
        %v1311 = vpack.c.bf16 %v1307, %v1307
        %v1312 = vpack.c.bf16 %v1308, %v1308
        %v1313 = vpack.c.bf16 %v1309, %v1309
        %v1314 = vpack.c.bf16 %v1310, %v1310
        %v1317 = vunpack.c.l.b16 %v1311
        %v1318 = vunpack.c.l.b16 %v1312
        %v1319 = vpack.c.b16 %v1318, %v1317
        %1320 = vrot.lane.b32.xlu0 %v1067, 56
        %v1321 = vpop.permute.xlu0 %1320
        %v1324 = vsel %vm1118, %v1319, 0
        %1326 = vmatpush.bf16.msra.mxu0 0
        %1327 = vmatpush.bf16.msra.mxu0 0
        %1328 = vmatpush.bf16.msra.mxu0 0
        %1329 = vmatpush.bf16.msra.mxu0 0
        %1330 = vmatpush.bf16.msra.mxu0 0
        %1331 = vmatpush.bf16.msra.mxu0 0
        %1332 = vmatpush.bf16.msra.mxu0 0
        %1333 = vmatpush.bf16.msra.mxu0 %v1321
        %1334 = vmatmul.bf16.gmra.mxu0 %v1324
        %v1335 = vpop.f32.mrf.mxu0
        %v1336 = vadd.f32 0.0, %v1335
        %v1337 = vpop.f32.mrf.mxu0
        %v1338 = vadd.f32 0.0, %v1337
        %1339 = vdwg.mxu0
        %v1342 = vunpack.c.l.b16 %v1313
        %v1343 = vunpack.c.l.b16 %v1314
        %v1344 = vpack.c.b16 %v1343, %v1342
        %1345 = vrot.lane.b32.xlu0 %v1095, 56
        %v1346 = vpop.permute.xlu0 %1345
        %v1349 = vsel %vm1118, %v1344, 0
        %1351 = vmatpush.bf16.msra.mxu0 0
        %1352 = vmatpush.bf16.msra.mxu0 0
        %1353 = vmatpush.bf16.msra.mxu0 0
        %1354 = vmatpush.bf16.msra.mxu0 0
        %1355 = vmatpush.bf16.msra.mxu0 0
        %1356 = vmatpush.bf16.msra.mxu0 0
        %1357 = vmatpush.bf16.msra.mxu0 0
        %1358 = vmatpush.bf16.msra.mxu0 %v1346
        %1359 = vmatmul.bf16.gmra.mxu0 %v1349
        %v1360 = vpop.f32.mrf.mxu0
        %v1361 = vadd.f32 0.0, %v1360
        %v1362 = vpop.f32.mrf.mxu0
        %v1363 = vadd.f32 0.0, %v1362
        %1364 = vdwg.mxu0
        %v1365 = vpack.c.bf16 %v1338, %v1336
        %v1366 = vpack.c.bf16 %v1363, %v1361
        %v1368 = vsel %vm1070, %v1365, 0
        %v1371 = vsel %vm1070, %v1366, 0
        %vm1373 = vcmask 1043456
        %v1375 = vsel %vm1373, %v1060, 0
        %1377 = vmatpush.bf16.msra.mxu0 0
        %1378 = vmatpush.bf16.msra.mxu0 0
        %1379 = vmatpush.bf16.msra.mxu0 0
        %1380 = vmatpush.bf16.msra.mxu0 0
        %1381 = vmatpush.bf16.msra.mxu0 0
        %1382 = vmatpush.bf16.msra.mxu0 0
        %1383 = vmatpush.bf16.msra.mxu0 0
        %1384 = vmatpush.bf16.msra.mxu0 %v1375
        %1385 = vmatmul.bf16.gmra.mxu0 %v1368
        %v1386 = vpop.f32.mrf.mxu0
        %v1387 = vadd.f32 0.0, %v1386
        %v1388 = vpop.f32.mrf.mxu0
        %v1389 = vadd.f32 0.0, %v1388
        %1390 = vmatmul.bf16.gmra.mxu0 %v1371
        %v1391 = vpop.f32.mrf.mxu0
        %v1392 = vadd.f32 0.0, %v1391
        %v1393 = vpop.f32.mrf.mxu0
        %v1394 = vadd.f32 0.0, %v1393
        %1395 = vdwg.mxu0
        %v1397 = vsel %vm1070, %v1217, 0
        %v1400 = vsel %vm1070, %v1218, 0
        %v1403 = vsel %vm1373, %v1059, 0
        %1405 = vmatpush.bf16.msra.mxu0 0
        %1406 = vmatpush.bf16.msra.mxu0 0
        %1407 = vmatpush.bf16.msra.mxu0 0
        %1408 = vmatpush.bf16.msra.mxu0 0
        %1409 = vmatpush.bf16.msra.mxu0 0
        %1410 = vmatpush.bf16.msra.mxu0 0
        %1411 = vmatpush.bf16.msra.mxu0 0
        %1412 = vmatpush.bf16.msra.mxu0 %v1403
        %1413 = vmatmul.bf16.gmra.mxu0 %v1397
        %v1414 = vpop.f32.mrf.mxu0
        %v1415 = vadd.f32 %v1387, %v1414
        %v1416 = vpop.f32.mrf.mxu0
        %v1417 = vadd.f32 %v1389, %v1416
        %1418 = vmatmul.bf16.gmra.mxu0 %v1400
        %v1419 = vpop.f32.mrf.mxu0
        %v1420 = vadd.f32 %v1392, %v1419
        %v1421 = vpop.f32.mrf.mxu0
        %v1422 = vadd.f32 %v1394, %v1421
        %1423 = vdwg.mxu0
        %1424 = vrot.lane.b32.xlu0 %v1067, 112
        %v1425 = vpop.permute.xlu0 %1424
        %1426 = vrot.lane.b32.xlu0 %v1067, 80
        %v1427 = vpop.permute.xlu0 %1426
        %v1429 = vsel %vm1070, %v1425, 0
        %v1432 = vsel %vm1070, %v1427, 0
        %1434 = vmatpush.bf16.xpose.msra.mxu0 0
        %1435 = vmatpush.bf16.xpose.msra.mxu0 0
        %1436 = vmatpush.bf16.xpose.msra.mxu0 0
        %1437 = vmatpush.bf16.xpose.msra.mxu0 0
        %1438 = vmatpush.bf16.xpose.msra.mxu0 0
        %1439 = vmatpush.bf16.xpose.msra.mxu0 0
        %1440 = vmatpush.bf16.xpose.msra.mxu0 0
        %1441 = vmatpush.bf16.xpose.msra.mxu0 %v1432
        %1442 = vmatmul.bf16.gmra.mxu0 %v1429
        %v1443 = vpop.f32.mrf.mxu0
        %v1444 = vadd.f32 0.0, %v1443
        %v1445 = vpop.f32.mrf.mxu0
        %v1446 = vadd.f32 0.0, %v1445
        %1447 = vdwg.mxu0
        %1448 = vrot.lane.b32.xlu0 %v1095, 112
        %v1449 = vpop.permute.xlu0 %1448
        %1450 = vrot.lane.b32.xlu0 %v1095, 80
        %v1451 = vpop.permute.xlu0 %1450
        %v1453 = vsel %vm1070, %v1449, 0
        %v1456 = vsel %vm1070, %v1451, 0
        %1458 = vmatpush.bf16.xpose.msra.mxu0 0
        %1459 = vmatpush.bf16.xpose.msra.mxu0 0
        %1460 = vmatpush.bf16.xpose.msra.mxu0 0
        %1461 = vmatpush.bf16.xpose.msra.mxu0 0
        %1462 = vmatpush.bf16.xpose.msra.mxu0 0
        %1463 = vmatpush.bf16.xpose.msra.mxu0 0
        %1464 = vmatpush.bf16.xpose.msra.mxu0 0
        %1465 = vmatpush.bf16.xpose.msra.mxu0 %v1456
        %1466 = vmatmul.bf16.gmra.mxu0 %v1453
        %v1467 = vpop.f32.mrf.mxu0
        %v1468 = vadd.f32 0.0, %v1467
        %v1469 = vpop.f32.mrf.mxu0
        %v1470 = vadd.f32 0.0, %v1469
        %1471 = vdwg.mxu0
        %v1472 = vsel %vm1118, %v1444, -inf
        %1473 = vmax.xlane.f32.xlu0 %v1472
        %v1474 = vpop.xlane.xlu0 %1473
        %v1475 = vsel %vm1118, %v1446, -inf
        %1476 = vmax.xlane.f32.xlu0 %v1475
        %v1477 = vpop.xlane.xlu0 %1476
        %v1478 = vsel %vm1118, %v1468, -inf
        %1479 = vmax.xlane.f32.xlu0 %v1478
        %v1480 = vpop.xlane.xlu0 %1479
        %v1481 = vsel %vm1118, %v1470, -inf
        %1482 = vmax.xlane.f32.xlu0 %v1481
        %v1483 = vpop.xlane.xlu0 %1482
        %v1484 = vsub.f32 %v1444, %v1474
        %v1485 = vsub.f32 %v1446, %v1477
        %v1486 = vsub.f32 %v1468, %v1480
        %v1487 = vsub.f32 %v1470, %v1483
        %v1488 = vmul.f32 %v1484, 1.442695
        %v1489 = vpow.pop %v1488
        %v1490 = vmul.f32 %v1485, 1.442695
        %v1491 = vpow.pop %v1490
        %v1492 = vmul.f32 %v1486, 1.442695
        %v1493 = vpow.pop %v1492
        %v1494 = vmul.f32 %v1487, 1.442695
        %v1495 = vpow.pop %v1494
        %v1496 = vsel %vm1118, %v1489, 0.0
        %1497 = vadd.xlane.f32.xlu0 %v1496
        %v1498 = vpop.xlane.xlu0 %1497
        %v1499 = vsel %vm1118, %v1491, 0.0
        %1500 = vadd.xlane.f32.xlu0 %v1499
        %v1501 = vpop.xlane.xlu0 %1500
        %v1502 = vsel %vm1118, %v1493, 0.0
        %1503 = vadd.xlane.f32.xlu0 %v1502
        %v1504 = vpop.xlane.xlu0 %1503
        %v1505 = vsel %vm1118, %v1495, 0.0
        %1506 = vadd.xlane.f32.xlu0 %v1505
        %v1507 = vpop.xlane.xlu0 %1506
        %v1508 = vrcp.pop %v1498
        %v1509 = vrcp.pop %v1501
        %v1510 = vrcp.pop %v1504
        %v1511 = vrcp.pop %v1507
        %v1512 = vmul.f32 %v1489, %v1508
        %v1513 = vmul.f32 %v1491, %v1509
        %v1514 = vmul.f32 %v1493, %v1510
        %v1515 = vmul.f32 %v1495, %v1511
        %v1516 = vpack.c.bf16 %v1512, %v1512
        %v1517 = vpack.c.bf16 %v1513, %v1513
        %v1518 = vpack.c.bf16 %v1514, %v1514
        %v1519 = vpack.c.bf16 %v1515, %v1515
        %v1522 = vunpack.c.l.b16 %v1516
        %v1523 = vunpack.c.l.b16 %v1517
        %v1524 = vpack.c.b16 %v1523, %v1522
        %1525 = vrot.lane.b32.xlu0 %v1067, 48
        %v1526 = vpop.permute.xlu0 %1525
        %v1529 = vsel %vm1118, %v1524, 0
        %1531 = vmatpush.bf16.msra.mxu0 0
        %1532 = vmatpush.bf16.msra.mxu0 0
        %1533 = vmatpush.bf16.msra.mxu0 0
        %1534 = vmatpush.bf16.msra.mxu0 0
        %1535 = vmatpush.bf16.msra.mxu0 0
        %1536 = vmatpush.bf16.msra.mxu0 0
        %1537 = vmatpush.bf16.msra.mxu0 0
        %1538 = vmatpush.bf16.msra.mxu0 %v1526
        %1539 = vmatmul.bf16.gmra.mxu0 %v1529
        %v1540 = vpop.f32.mrf.mxu0
        %v1541 = vadd.f32 0.0, %v1540
        %v1542 = vpop.f32.mrf.mxu0
        %v1543 = vadd.f32 0.0, %v1542
        %1544 = vdwg.mxu0
        %v1547 = vunpack.c.l.b16 %v1518
        %v1548 = vunpack.c.l.b16 %v1519
        %v1549 = vpack.c.b16 %v1548, %v1547
        %1550 = vrot.lane.b32.xlu0 %v1095, 48
        %v1551 = vpop.permute.xlu0 %1550
        %v1554 = vsel %vm1118, %v1549, 0
        %1556 = vmatpush.bf16.msra.mxu0 0
        %1557 = vmatpush.bf16.msra.mxu0 0
        %1558 = vmatpush.bf16.msra.mxu0 0
        %1559 = vmatpush.bf16.msra.mxu0 0
        %1560 = vmatpush.bf16.msra.mxu0 0
        %1561 = vmatpush.bf16.msra.mxu0 0
        %1562 = vmatpush.bf16.msra.mxu0 0
        %1563 = vmatpush.bf16.msra.mxu0 %v1551
        %1564 = vmatmul.bf16.gmra.mxu0 %v1554
        %v1565 = vpop.f32.mrf.mxu0
        %v1566 = vadd.f32 0.0, %v1565
        %v1567 = vpop.f32.mrf.mxu0
        %v1568 = vadd.f32 0.0, %v1567
        %1569 = vdwg.mxu0
        %v1570 = vpack.c.bf16 %v1543, %v1541
        %v1571 = vpack.c.bf16 %v1568, %v1566
        %v1573 = vsel %vm1070, %v1570, 0
        %v1576 = vsel %vm1070, %v1571, 0
        %v1579 = vsel %vm1373, %v1061, 0
        %1581 = vmatpush.bf16.msra.mxu0 0
        %1582 = vmatpush.bf16.msra.mxu0 0
        %1583 = vmatpush.bf16.msra.mxu0 0
        %1584 = vmatpush.bf16.msra.mxu0 0
        %1585 = vmatpush.bf16.msra.mxu0 0
        %1586 = vmatpush.bf16.msra.mxu0 0
        %1587 = vmatpush.bf16.msra.mxu0 0
        %1588 = vmatpush.bf16.msra.mxu0 %v1579
        %1589 = vmatmul.bf16.gmra.mxu0 %v1573
        %v1590 = vpop.f32.mrf.mxu0
        %v1591 = vadd.f32 0.0, %v1590
        %v1592 = vpop.f32.mrf.mxu0
        %v1593 = vadd.f32 0.0, %v1592
        %1594 = vmatmul.bf16.gmra.mxu0 %v1576
        %v1595 = vpop.f32.mrf.mxu0
        %v1596 = vadd.f32 0.0, %v1595
        %v1597 = vpop.f32.mrf.mxu0
        %v1598 = vadd.f32 0.0, %v1597
        %1599 = vdwg.mxu0
        %v1600 = vadd.f32 %v1415, %v1591
        %v1601 = vadd.f32 %v1417, %v1593
        %v1602 = vadd.f32 %v1420, %v1596
        %v1603 = vadd.f32 %v1422, %v1598
        %1604 = vrot.lane.b32.xlu0 %v1067, 104
        %v1605 = vpop.permute.xlu0 %1604
        %1606 = vrot.lane.b32.xlu0 %v1067, 72
        %v1607 = vpop.permute.xlu0 %1606
        %v1609 = vsel %vm1070, %v1605, 0
        %v1612 = vsel %vm1070, %v1607, 0
        %1614 = vmatpush.bf16.xpose.msra.mxu0 0
        %1615 = vmatpush.bf16.xpose.msra.mxu0 0
        %1616 = vmatpush.bf16.xpose.msra.mxu0 0
        %1617 = vmatpush.bf16.xpose.msra.mxu0 0
        %1618 = vmatpush.bf16.xpose.msra.mxu0 0
        %1619 = vmatpush.bf16.xpose.msra.mxu0 0
        %1620 = vmatpush.bf16.xpose.msra.mxu0 0
        %1621 = vmatpush.bf16.xpose.msra.mxu0 %v1612
        %1622 = vmatmul.bf16.gmra.mxu0 %v1609
        %v1623 = vpop.f32.mrf.mxu0
        %v1624 = vadd.f32 0.0, %v1623
        %v1625 = vpop.f32.mrf.mxu0
        %v1626 = vadd.f32 0.0, %v1625
        %1627 = vdwg.mxu0
        %1628 = vrot.lane.b32.xlu0 %v1095, 104
        %v1629 = vpop.permute.xlu0 %1628
        %1630 = vrot.lane.b32.xlu0 %v1095, 72
        %v1631 = vpop.permute.xlu0 %1630
        %v1633 = vsel %vm1070, %v1629, 0
        %v1636 = vsel %vm1070, %v1631, 0
        %1638 = vmatpush.bf16.xpose.msra.mxu0 0
        %1639 = vmatpush.bf16.xpose.msra.mxu0 0
        %1640 = vmatpush.bf16.xpose.msra.mxu0 0
        %1641 = vmatpush.bf16.xpose.msra.mxu0 0
        %1642 = vmatpush.bf16.xpose.msra.mxu0 0
        %1643 = vmatpush.bf16.xpose.msra.mxu0 0
        %1644 = vmatpush.bf16.xpose.msra.mxu0 0
        %1645 = vmatpush.bf16.xpose.msra.mxu0 %v1636
        %1646 = vmatmul.bf16.gmra.mxu0 %v1633
        %v1647 = vpop.f32.mrf.mxu0
        %v1648 = vadd.f32 0.0, %v1647
        %v1649 = vpop.f32.mrf.mxu0
        %v1650 = vadd.f32 0.0, %v1649
        %1651 = vdwg.mxu0
        %v1652 = vsel %vm1118, %v1624, -inf
        %1653 = vmax.xlane.f32.xlu0 %v1652
        %v1654 = vpop.xlane.xlu0 %1653
        %v1655 = vsel %vm1118, %v1626, -inf
        %1656 = vmax.xlane.f32.xlu0 %v1655
        %v1657 = vpop.xlane.xlu0 %1656
        %v1658 = vsel %vm1118, %v1648, -inf
        %1659 = vmax.xlane.f32.xlu0 %v1658
        %v1660 = vpop.xlane.xlu0 %1659
        %v1661 = vsel %vm1118, %v1650, -inf
        %1662 = vmax.xlane.f32.xlu0 %v1661
        %v1663 = vpop.xlane.xlu0 %1662
        %v1664 = vsub.f32 %v1624, %v1654
        %v1665 = vsub.f32 %v1626, %v1657
        %v1666 = vsub.f32 %v1648, %v1660
        %v1667 = vsub.f32 %v1650, %v1663
        %v1668 = vmul.f32 %v1664, 1.442695
        %v1669 = vpow.pop %v1668
        %v1670 = vmul.f32 %v1665, 1.442695
        %v1671 = vpow.pop %v1670
        %v1672 = vmul.f32 %v1666, 1.442695
        %v1673 = vpow.pop %v1672
        %v1674 = vmul.f32 %v1667, 1.442695
        %v1675 = vpow.pop %v1674
        %v1676 = vsel %vm1118, %v1669, 0.0
        %1677 = vadd.xlane.f32.xlu0 %v1676
        %v1678 = vpop.xlane.xlu0 %1677
        %v1679 = vsel %vm1118, %v1671, 0.0
        %1680 = vadd.xlane.f32.xlu0 %v1679
        %v1681 = vpop.xlane.xlu0 %1680
        %v1682 = vsel %vm1118, %v1673, 0.0
        %1683 = vadd.xlane.f32.xlu0 %v1682
        %v1684 = vpop.xlane.xlu0 %1683
        %v1685 = vsel %vm1118, %v1675, 0.0
        %1686 = vadd.xlane.f32.xlu0 %v1685
        %v1687 = vpop.xlane.xlu0 %1686
        %v1688 = vrcp.pop %v1678
        %v1689 = vrcp.pop %v1681
        %v1690 = vrcp.pop %v1684
        %v1691 = vrcp.pop %v1687
        %v1692 = vmul.f32 %v1669, %v1688
        %v1693 = vmul.f32 %v1671, %v1689
        %v1694 = vmul.f32 %v1673, %v1690
        %v1695 = vmul.f32 %v1675, %v1691
        %v1696 = vpack.c.bf16 %v1692, %v1692
        %v1697 = vpack.c.bf16 %v1693, %v1693
        %v1698 = vpack.c.bf16 %v1694, %v1694
        %v1699 = vpack.c.bf16 %v1695, %v1695
        %v1702 = vunpack.c.l.b16 %v1696
        %v1703 = vunpack.c.l.b16 %v1697
        %v1704 = vpack.c.b16 %v1703, %v1702
        %1705 = vrot.lane.b32.xlu0 %v1067, 40
        %v1706 = vpop.permute.xlu0 %1705
        %v1709 = vsel %vm1118, %v1704, 0
        %1711 = vmatpush.bf16.msra.mxu0 0
        %1712 = vmatpush.bf16.msra.mxu0 0
        %1713 = vmatpush.bf16.msra.mxu0 0
        %1714 = vmatpush.bf16.msra.mxu0 0
        %1715 = vmatpush.bf16.msra.mxu0 0
        %1716 = vmatpush.bf16.msra.mxu0 0
        %1717 = vmatpush.bf16.msra.mxu0 0
        %1718 = vmatpush.bf16.msra.mxu0 %v1706
        %1719 = vmatmul.bf16.gmra.mxu0 %v1709
        %v1720 = vpop.f32.mrf.mxu0
        %v1721 = vadd.f32 0.0, %v1720
        %v1722 = vpop.f32.mrf.mxu0
        %v1723 = vadd.f32 0.0, %v1722
        %1724 = vdwg.mxu0
        %v1727 = vunpack.c.l.b16 %v1698
        %v1728 = vunpack.c.l.b16 %v1699
        %v1729 = vpack.c.b16 %v1728, %v1727
        %1730 = vrot.lane.b32.xlu0 %v1095, 40
        %v1731 = vpop.permute.xlu0 %1730
        %v1734 = vsel %vm1118, %v1729, 0
        %1736 = vmatpush.bf16.msra.mxu0 0
        %1737 = vmatpush.bf16.msra.mxu0 0
        %1738 = vmatpush.bf16.msra.mxu0 0
        %1739 = vmatpush.bf16.msra.mxu0 0
        %1740 = vmatpush.bf16.msra.mxu0 0
        %1741 = vmatpush.bf16.msra.mxu0 0
        %1742 = vmatpush.bf16.msra.mxu0 0
        %1743 = vmatpush.bf16.msra.mxu0 %v1731
        %1744 = vmatmul.bf16.gmra.mxu0 %v1734
        %v1745 = vpop.f32.mrf.mxu0
        %v1746 = vadd.f32 0.0, %v1745
        %v1747 = vpop.f32.mrf.mxu0
        %v1748 = vadd.f32 0.0, %v1747
        %1749 = vdwg.mxu0
        %v1750 = vpack.c.bf16 %v1723, %v1721
        %v1751 = vpack.c.bf16 %v1748, %v1746
        %v1753 = vsel %vm1070, %v1750, 0
        %v1756 = vsel %vm1070, %v1751, 0
        %v1759 = vsel %vm1373, %v1062, 0
        %1761 = vmatpush.bf16.msra.mxu0 0
        %1762 = vmatpush.bf16.msra.mxu0 0
        %1763 = vmatpush.bf16.msra.mxu0 0
        %1764 = vmatpush.bf16.msra.mxu0 0
        %1765 = vmatpush.bf16.msra.mxu0 0
        %1766 = vmatpush.bf16.msra.mxu0 0
        %1767 = vmatpush.bf16.msra.mxu0 0
        %1768 = vmatpush.bf16.msra.mxu0 %v1759
        %1769 = vmatmul.bf16.gmra.mxu0 %v1753
        %v1770 = vpop.f32.mrf.mxu0
        %v1771 = vadd.f32 0.0, %v1770
        %v1772 = vpop.f32.mrf.mxu0
        %v1773 = vadd.f32 0.0, %v1772
        %1774 = vmatmul.bf16.gmra.mxu0 %v1756
        %v1775 = vpop.f32.mrf.mxu0
        %v1776 = vadd.f32 0.0, %v1775
        %v1777 = vpop.f32.mrf.mxu0
        %v1778 = vadd.f32 0.0, %v1777
        %1779 = vdwg.mxu0
        %v1780 = vadd.f32 %v1600, %v1771
        %v1781 = vadd.f32 %v1601, %v1773
        %v1782 = vadd.f32 %v1602, %v1776
        %v1783 = vadd.f32 %v1603, %v1778
        %v1784 = vld [vmem:[%s841] sm:$0x1]
        %v1786 = vperm.slane %v1784, 0
        %v1788 = vadd.f32 %v1780, %v1786
        %v1789 = vadd.f32 %v1781, %v1786
        %v1790 = vadd.f32 %v1782, %v1786
        %v1791 = vadd.f32 %v1783, %v1786
        %v1792 = vadd.f32 %v1003, %v1788
        %v1793 = vadd.f32 %v1004, %v1789
        %v1794 = vadd.f32 %v1005, %v1790
        %v1795 = vadd.f32 %v1006, %v1791
        %v1796 = vld [vmem:[%s844] sm:$0x1]
        %v1797 = vld [vmem:[%s847] sm:$0x1]
        %v1798 = vsel %vm1029, %v1792, 0.0
        %1799 = vadd.xlane.f32.xlu0 %v1798
        %v1800 = vpop.xlane.xlu0 %1799
        %v1801 = vsel %vm1029, %v1793, 0.0
        %1802 = vadd.xlane.f32.xlu0 %v1801
        %v1803 = vpop.xlane.xlu0 %1802
        %v1804 = vsel %vm1029, %v1794, 0.0
        %1805 = vadd.xlane.f32.xlu0 %v1804
        %v1806 = vpop.xlane.xlu0 %1805
        %v1807 = vsel %vm1029, %v1795, 0.0
        %1808 = vadd.xlane.f32.xlu0 %v1807
        %v1809 = vpop.xlane.xlu0 %1808
        %v1810 = vrcp.pop 32.0
        %v1811 = vmul.f32 32.0, %v1810
        %v1812 = vsub.f32 1.0, %v1811
        %v1813 = vmul.f32 %v1810, %v1812
        %v1814 = vadd.f32 %v1810, %v1813
        %vm1815 = vweird.f32 %v1810
        %v1816 = vsel %vm1815, %v1810, %v1814
        %v1817 = vmul.f32 %v1800, %v1816
        %v1818 = vmul.f32 %v1803, %v1816
        %v1819 = vmul.f32 %v1806, %v1816
        %v1820 = vmul.f32 %v1809, %v1816
        %v1821 = vsub.f32 %v1792, %v1817
        %v1822 = vsub.f32 %v1793, %v1818
        %v1823 = vsub.f32 %v1794, %v1819
        %v1824 = vsub.f32 %v1795, %v1820
        %v1825 = vmul.f32 %v1821, %v1821
        %v1826 = vmul.f32 %v1822, %v1822
        %v1827 = vmul.f32 %v1823, %v1823
        %v1828 = vmul.f32 %v1824, %v1824
        %v1829 = vsel %vm1029, %v1825, 0.0
        %1830 = vadd.xlane.f32.xlu0 %v1829
        %v1831 = vpop.xlane.xlu0 %1830
        %v1832 = vsel %vm1029, %v1826, 0.0
        %1833 = vadd.xlane.f32.xlu0 %v1832
        %v1834 = vpop.xlane.xlu0 %1833
        %v1835 = vsel %vm1029, %v1827, 0.0
        %1836 = vadd.xlane.f32.xlu0 %v1835
        %v1837 = vpop.xlane.xlu0 %1836
        %v1838 = vsel %vm1029, %v1828, 0.0
        %1839 = vadd.xlane.f32.xlu0 %v1838
        %v1840 = vpop.xlane.xlu0 %1839
        %v1841 = vmul.f32 %v1831, %v1816
        %v1842 = vmul.f32 %v1834, %v1816
        %v1843 = vmul.f32 %v1837, %v1816
        %v1844 = vmul.f32 %v1840, %v1816
        %v1845 = vadd.f32 %v1841, 1e-05
        %v1846 = vadd.f32 %v1842, 1e-05
        %v1847 = vadd.f32 %v1843, 1e-05
        %v1848 = vadd.f32 %v1844, 1e-05
        %v1849 = vrsqrt.pop %v1845
        %v1850 = vmul.f32 %v1849, %v1845
        %v1851 = vmul.f32 %v1850, %v1849
        %v1852 = vmul.f32 0.5, %v1851
        %v1853 = vsub.f32 1.5, %v1852
        %v1854 = vmul.f32 %v1849, %v1853
        %vm1855 = vweird.f32 %v1845
        %vm1856 = vweird.f32 %v1849
        %vm1857 = vmor %vm1855, %vm1856
        %v1858 = vsel %vm1857, %v1849, %v1854
        %v1859 = vrsqrt.pop %v1846
        %v1860 = vmul.f32 %v1859, %v1846
        %v1861 = vmul.f32 %v1860, %v1859
        %v1862 = vmul.f32 0.5, %v1861
        %v1863 = vsub.f32 1.5, %v1862
        %v1864 = vmul.f32 %v1859, %v1863
        %vm1865 = vweird.f32 %v1846
        %vm1866 = vweird.f32 %v1859
        %vm1867 = vmor %vm1865, %vm1866
        %v1868 = vsel %vm1867, %v1859, %v1864
        %v1869 = vrsqrt.pop %v1847
        %v1870 = vmul.f32 %v1869, %v1847
        %v1871 = vmul.f32 %v1870, %v1869
        %v1872 = vmul.f32 0.5, %v1871
        %v1873 = vsub.f32 1.5, %v1872
        %v1874 = vmul.f32 %v1869, %v1873
        %vm1875 = vweird.f32 %v1847
        %vm1876 = vweird.f32 %v1869
        %vm1877 = vmor %vm1875, %vm1876
        %v1878 = vsel %vm1877, %v1869, %v1874
        %v1879 = vrsqrt.pop %v1848
        %v1880 = vmul.f32 %v1879, %v1848
        %v1881 = vmul.f32 %v1880, %v1879
        %v1882 = vmul.f32 0.5, %v1881
        %v1883 = vsub.f32 1.5, %v1882
        %v1884 = vmul.f32 %v1879, %v1883
        %vm1885 = vweird.f32 %v1848
        %vm1886 = vweird.f32 %v1879
        %vm1887 = vmor %vm1885, %vm1886
        %v1888 = vsel %vm1887, %v1879, %v1884
        %v1889 = vmul.f32 %v1821, %v1858
        %v1890 = vmul.f32 %v1822, %v1868
        %v1891 = vmul.f32 %v1823, %v1878
        %v1892 = vmul.f32 %v1824, %v1888
        %v1894 = vperm.slane %v1796, 0
        %v1896 = vmul.f32 %v1889, %v1894
        %v1897 = vmul.f32 %v1890, %v1894
        %v1898 = vmul.f32 %v1891, %v1894
        %v1899 = vmul.f32 %v1892, %v1894
        %v1901 = vperm.slane %v1797, 0
        %v1903 = vadd.f32 %v1896, %v1901
        %v1904 = vadd.f32 %v1897, %v1901
        %v1905 = vadd.f32 %v1898, %v1901
        %v1906 = vadd.f32 %v1899, %v1901
        %v1907 = vpack.c.bf16 %v1904, %v1903
        %v1908 = vpack.c.bf16 %v1906, %v1905
        %v1909 = vld [vmem:[%s738] sm:$0xf]
        %v1910 = vld [vmem:[%s738 + $0x4] sm:$0xf]
        %v1911 = vld [vmem:[%s738 + $0x8] sm:$0xf]
        %v1912 = vld [vmem:[%s738 + $0xc] sm:$0xf]
        %v1913 = vld [vmem:[%s850] sm:$0x1]
        %v1915 = vperm.slane %v1913, 0
        %v1921 = vunpack.c.l.b16 %v1909
        %v1922 = vunpack.c.l.b16 %v1910
        %v1923 = vunpack.c.l.b16 %v1911
        %v1924 = vunpack.c.l.b16 %v1912
        %v1925 = vpack.c.b16 %v1922, %v1921
        %v1926 = vpack.c.b16 %v1924, %v1923
        %v1930 = vsel %vm1029, %v1907, 0
        %v1933 = vsel %vm1029, %v1908, 0
        %1935 = vmatpush.bf16.msra.mxu0 0
        %1936 = vmatpush.bf16.msra.mxu0 0
        %1937 = vmatpush.bf16.msra.mxu0 0
        %1938 = vmatpush.bf16.msra.mxu0 0
        %1939 = vmatpush.bf16.msra.mxu0 0
        %1940 = vmatpush.bf16.msra.mxu0 0
        %1941 = vmatpush.bf16.msra.mxu0 %v1926
        %1942 = vmatpush.bf16.msra.mxu0 %v1925
        %1943 = vmatmul.bf16.gmra.mxu0 %v1930
        %v1944 = vpop.f32.mrf.mxu0
        %v1945 = vadd.f32 %v1915, %v1944
        %v1946 = vpop.f32.mrf.mxu0
        %v1947 = vadd.f32 %v1915, %v1946
        %1948 = vmatmul.bf16.gmra.mxu0 %v1933
        %v1949 = vpop.f32.mrf.mxu0
        %v1950 = vadd.f32 %v1915, %v1949
        %v1951 = vpop.f32.mrf.mxu0
        %v1952 = vadd.f32 %v1915, %v1951
        %1953 = vdwg.mxu0
        %v1954 = vmax.f32 %v1945, 0.0
        %v1955 = vmax.f32 %v1947, 0.0
        %v1956 = vmax.f32 %v1950, 0.0
        %v1957 = vmax.f32 %v1952, 0.0
        %v1958 = vpack.c.bf16 %v1955, %v1954
        %v1959 = vpack.c.bf16 %v1957, %v1956
        %v1960 = vld [vmem:[%s748] sm:$0xf]
        %v1961 = vld [vmem:[%s748 + $0x4] sm:$0xf]
        %v1962 = vld [vmem:[%s748 + $0x8] sm:$0xf]
        %v1963 = vld [vmem:[%s748 + $0xc] sm:$0xf]
        %v1964 = vld [vmem:[%s853] sm:$0x1]
        %v1966 = vperm.slane %v1964, 0
        %v1972 = vunpack.c.l.b16 %v1960
        %v1973 = vunpack.c.l.b16 %v1961
        %v1974 = vunpack.c.l.b16 %v1962
        %v1975 = vunpack.c.l.b16 %v1963
        %v1976 = vpack.c.b16 %v1973, %v1972
        %v1977 = vpack.c.b16 %v1975, %v1974
        %v1981 = vsel %vm1029, %v1958, 0
        %v1984 = vsel %vm1029, %v1959, 0
        %1986 = vmatpush.bf16.msra.mxu0 0
        %1987 = vmatpush.bf16.msra.mxu0 0
        %1988 = vmatpush.bf16.msra.mxu0 0
        %1989 = vmatpush.bf16.msra.mxu0 0
        %1990 = vmatpush.bf16.msra.mxu0 0
        %1991 = vmatpush.bf16.msra.mxu0 0
        %1992 = vmatpush.bf16.msra.mxu0 %v1977
        %1993 = vmatpush.bf16.msra.mxu0 %v1976
        %1994 = vmatmul.bf16.gmra.mxu0 %v1981
        %v1995 = vpop.f32.mrf.mxu0
        %v1996 = vadd.f32 %v1966, %v1995
        %v1997 = vpop.f32.mrf.mxu0
        %v1998 = vadd.f32 %v1966, %v1997
        %1999 = vmatmul.bf16.gmra.mxu0 %v1984
        %v2000 = vpop.f32.mrf.mxu0
        %v2001 = vadd.f32 %v1966, %v2000
        %v2002 = vpop.f32.mrf.mxu0
        %v2003 = vadd.f32 %v1966, %v2002
        %2004 = vdwg.mxu0
        %v2005 = vadd.f32 %v1903, %v1996
        %v2006 = vadd.f32 %v1904, %v1998
        %v2007 = vadd.f32 %v1905, %v2001
        %v2008 = vadd.f32 %v1906, %v2003
        %v2009 = vld [vmem:[%s856] sm:$0x1]
        %v2010 = vld [vmem:[%s859] sm:$0x1]
        %v2011 = vsel %vm1029, %v2005, 0.0
        %2012 = vadd.xlane.f32.xlu0 %v2011
        %v2013 = vpop.xlane.xlu0 %2012
        %v2014 = vsel %vm1029, %v2006, 0.0
        %2015 = vadd.xlane.f32.xlu0 %v2014
        %v2016 = vpop.xlane.xlu0 %2015
        %v2017 = vsel %vm1029, %v2007, 0.0
        %2018 = vadd.xlane.f32.xlu0 %v2017
        %v2019 = vpop.xlane.xlu0 %2018
        %v2020 = vsel %vm1029, %v2008, 0.0
        %2021 = vadd.xlane.f32.xlu0 %v2020
        %v2022 = vpop.xlane.xlu0 %2021
        %v2023 = vmul.f32 %v2013, %v1816
        %v2024 = vmul.f32 %v2016, %v1816
        %v2025 = vmul.f32 %v2019, %v1816
        %v2026 = vmul.f32 %v2022, %v1816
        %v2027 = vsub.f32 %v2005, %v2023
        %v2028 = vsub.f32 %v2006, %v2024
        %v2029 = vsub.f32 %v2007, %v2025
        %v2030 = vsub.f32 %v2008, %v2026
        %v2031 = vmul.f32 %v2027, %v2027
        %v2032 = vmul.f32 %v2028, %v2028
        %v2033 = vmul.f32 %v2029, %v2029
        %v2034 = vmul.f32 %v2030, %v2030
        %v2035 = vsel %vm1029, %v2031, 0.0
        %2036 = vadd.xlane.f32.xlu0 %v2035
        %v2037 = vpop.xlane.xlu0 %2036
        %v2038 = vsel %vm1029, %v2032, 0.0
        %2039 = vadd.xlane.f32.xlu0 %v2038
        %v2040 = vpop.xlane.xlu0 %2039
        %v2041 = vsel %vm1029, %v2033, 0.0
        %2042 = vadd.xlane.f32.xlu0 %v2041
        %v2043 = vpop.xlane.xlu0 %2042
        %v2044 = vsel %vm1029, %v2034, 0.0
        %2045 = vadd.xlane.f32.xlu0 %v2044
        %v2046 = vpop.xlane.xlu0 %2045
        %v2047 = vmul.f32 %v2037, %v1816
        %v2048 = vmul.f32 %v2040, %v1816
        %v2049 = vmul.f32 %v2043, %v1816
        %v2050 = vmul.f32 %v2046, %v1816
        %v2051 = vadd.f32 %v2047, 1e-05
        %v2052 = vadd.f32 %v2048, 1e-05
        %v2053 = vadd.f32 %v2049, 1e-05
        %v2054 = vadd.f32 %v2050, 1e-05
        %v2055 = vrsqrt.pop %v2051
        %v2056 = vmul.f32 %v2055, %v2051
        %v2057 = vmul.f32 %v2056, %v2055
        %v2058 = vmul.f32 0.5, %v2057
        %v2059 = vsub.f32 1.5, %v2058
        %v2060 = vmul.f32 %v2055, %v2059
        %vm2061 = vweird.f32 %v2051
        %vm2062 = vweird.f32 %v2055
        %vm2063 = vmor %vm2061, %vm2062
        %v2064 = vsel %vm2063, %v2055, %v2060
        %v2065 = vrsqrt.pop %v2052
        %v2066 = vmul.f32 %v2065, %v2052
        %v2067 = vmul.f32 %v2066, %v2065
        %v2068 = vmul.f32 0.5, %v2067
        %v2069 = vsub.f32 1.5, %v2068
        %v2070 = vmul.f32 %v2065, %v2069
        %vm2071 = vweird.f32 %v2052
        %vm2072 = vweird.f32 %v2065
        %vm2073 = vmor %vm2071, %vm2072
        %v2074 = vsel %vm2073, %v2065, %v2070
        %v2075 = vrsqrt.pop %v2053
        %v2076 = vmul.f32 %v2075, %v2053
        %v2077 = vmul.f32 %v2076, %v2075
        %v2078 = vmul.f32 0.5, %v2077
        %v2079 = vsub.f32 1.5, %v2078
        %v2080 = vmul.f32 %v2075, %v2079
        %vm2081 = vweird.f32 %v2053
        %vm2082 = vweird.f32 %v2075
        %vm2083 = vmor %vm2081, %vm2082
        %v2084 = vsel %vm2083, %v2075, %v2080
        %v2085 = vrsqrt.pop %v2054
        %v2086 = vmul.f32 %v2085, %v2054
        %v2087 = vmul.f32 %v2086, %v2085
        %v2088 = vmul.f32 0.5, %v2087
        %v2089 = vsub.f32 1.5, %v2088
        %v2090 = vmul.f32 %v2085, %v2089
        %vm2091 = vweird.f32 %v2054
        %vm2092 = vweird.f32 %v2085
        %vm2093 = vmor %vm2091, %vm2092
        %v2094 = vsel %vm2093, %v2085, %v2090
        %v2095 = vmul.f32 %v2027, %v2064
        %v2096 = vmul.f32 %v2028, %v2074
        %v2097 = vmul.f32 %v2029, %v2084
        %v2098 = vmul.f32 %v2030, %v2094
        %v2100 = vperm.slane %v2009, 0
        %v2102 = vmul.f32 %v2095, %v2100
        %v2103 = vmul.f32 %v2096, %v2100
        %v2104 = vmul.f32 %v2097, %v2100
        %v2105 = vmul.f32 %v2098, %v2100
        %v2107 = vperm.slane %v2010, 0
        %v2109 = vadd.f32 %v2102, %v2107
        %v2110 = vadd.f32 %v2103, %v2107
        %v2111 = vadd.f32 %v2104, %v2107
        %v2112 = vadd.f32 %v2105, %v2107
        %2113 = vst.msk [vmem:[#allocation2] sm:$0xff] %vm1029, %v2109
        %2114 = vst.msk [vmem:[#allocation2 + $0x8] sm:$0xff] %vm1029, %v2110
        %2115 = vst.msk [vmem:[#allocation2 + $0x10] sm:$0xff] %vm1029, %v2111
        %2116 = vst.msk [vmem:[#allocation2 + $0x18] sm:$0xff] %vm1029, %v2112
        %p2117 = scmp.eq.s32.totalorder %s38, 1
        // Predicated region
        $region125: #{tpu_custom_call.1} parent=91 // pred_check
          %p2118 = pneg %p2117
        $region126: #{tpu_custom_call.1} parent=91 // pred_check_branch
          %2120 = sbr.rel (%p2118) target = $region128
        $region127: #{tpu_custom_call.1} parent=91 // pred_region
          %2121 = vst.msk [vmem:[#allocation15] sm:$0xff] %vm1029, %v2109
          %2122 = vst.msk [vmem:[#allocation15 + $0x8] sm:$0xff] %vm1029, %v2110
          %2123 = vst.msk [vmem:[#allocation15 + $0x10] sm:$0xff] %vm1029, %v2111
          %2124 = vst.msk [vmem:[#allocation15 + $0x18] sm:$0xff] %vm1029, %v2112
        $region128: #{tpu_custom_call.1} parent=91 // pred_fallthru
          _
        // Predicated region
        $region129: #{tpu_custom_call.1} parent=91 // pred_check
          %p2125 = pneg %p489
        $region130: #{tpu_custom_call.1} parent=91 // pred_check_branch
          %2127 = sbr.rel (%p2125) target = $region132
        $region131: #{tpu_custom_call.1} parent=91 // pred_region
          %2129 = vsyncadd [#allocation5], 0
          %s2130 = sshll.u32 [#allocation15], 4
          %s2131 = int_to_ptr.vmem [resolvable:$true] %s2130
          %s2132 = sshll.u32 %s18, 4
          %s2133 = int_to_ptr.hbm [resolvable:$true] %s2132
          %2138 = dma.vmem_to_hbm [thread:$0]  %s2131, 512, %s2133, [#allocation5], 128, 128, 8
        $region132: #{tpu_custom_call.1} parent=91 // pred_fallthru
          _
        // Predicated region
        $region133: #{tpu_custom_call.1} parent=91 // pred_check
          %p2139 = pneg %p489
        $region134: #{tpu_custom_call.1} parent=91 // pred_check_branch
          %2141 = sbr.rel (%p2139) target = $region136
        $region135: #{tpu_custom_call.1} parent=91 // pred_region
          %2143 = dma.done [#allocation5], 512
        $region136: #{tpu_custom_call.1} parent=91 // pred_fallthru
          _
      $region92: #{tpu_custom_call.1} parent=5 // pred_fallthru
        _
      %p2144 = scmp.le.s32.totalorder 2, %s33
      // Predicated region
      $region137: #{tpu_custom_call.1} parent=5 // pred_check
        %p2145 = pneg %p2144
      $region138: #{tpu_custom_call.1} parent=5 // pred_check_branch
        %2147 = sbr.rel (%p2145) target = $region140
      $region139: #{tpu_custom_call.1} parent=5 // pred_region
        %s2148 = ssub.s32 %s33, 2
      $region140: #{tpu_custom_call.1} parent=5 // pred_fallthru
        _
    $region6: #{tpu_custom_call.1} parent=1 // loop_footer
      %s37 = sadd.s32 1, %s33
    $region7: #{tpu_custom_call.1} parent=1 // loop_footer_branch
      %32 = sbr.rel target = $region3
    $region8: #{tpu_custom_call.1} parent=1 // loop_exit
      _
    %2149 = vsyncpa [#allocation4], 1
    %s2150 = scalar_lea.sflag [#allocation4], 1
    %2151 = vsyncpa %s2150, 1
    %2152 = vsyncpa [#allocation7], 1
    %2153 = vsyncpa [#allocation10], 1
    %s2154 = scalar_lea.sflag [#allocation10], 1
    %2155 = vsyncpa %s2154, 1
    %2156 = vsyncpa [#allocation13], 1
    %s2157 = scalar_lea.sflag [#allocation13], 1
    %2158 = vsyncpa %s2157, 1
    %2159 = vsyncpa [#allocation5], 1
    %s2160 = scalar_lea.sflag [#allocation5], 1
    %2161 = vsyncpa %s2160, 1

</llo_original>
